<compile_context>
chip_gen: v6e
topology: v6e:2x2x1
jax: 0.10.0
libtpu: 0.0.40
codegen_flags: <defaults>
</compile_context>

<pallas_src>
import math
import functools

import jax
import jax.numpy as jnp
from jax.experimental import pallas as pl
from jax.experimental.pallas import tpu as pltpu

EPS = 1e-3

_PARAM_ORDER = ("wqkv", "bqkv", "gatt", "batt",
                "w1", "b1", "w2", "b2", "gff", "bff")


# ----------------------------------------------------------------------------
# In-kernel helpers
# ----------------------------------------------------------------------------
def _batchnorm(res, gamma, beta, rows):
    # BatchNorm1d over the (batch*seq) rows, per channel (training-mode biased
    # batch statistics, eps=1e-3).  Single-pass stats: sum + sum-of-squares,
    # var = E[x^2] - mean^2 (one axis=0 XLU reduction pass instead of two).
    inv = 1.0 / rows
    mean = jnp.sum(res, axis=0, keepdims=True) * inv
    mean_sq = jnp.sum(res * res, axis=0, keepdims=True) * inv
    var = mean_sq - mean * mean
    return (res - mean) * jax.lax.rsqrt(var + EPS) * gamma + beta


# ----------------------------------------------------------------------------
# One grid step == one encoder layer (attention + feed-forward)
# ----------------------------------------------------------------------------
def _encoder_layer_kernel(x_ref,
                          wqkv_ref, bqkv_ref, gatt_ref, batt_ref,
                          w1_ref, b1_ref, w2_ref, b2_ref, gff_ref, bff_ref,
                          o_ref, x_carry,
                          *, bs, seq, num_heads, head_dim, matmul_dtype):
    layer = pl.program_id(0)
    n = num_heads * head_dim
    rows = bs * seq
    scale = 1.0 / math.sqrt(head_dim)

    @pl.when(layer == 0)
    def _():
        x_carry[...] = x_ref[...]

    x = x_carry[...]                                   # (rows, n) f32, VMEM-resident

    # -------------------- Multi-head attention --------------------
    # Packed q|k|v projection: one MXU matmul + one bias add + one ReLU.
    qkv = jnp.maximum(
        jnp.dot(x.astype(matmul_dtype), wqkv_ref[...].astype(matmul_dtype),
                preferred_element_type=jnp.float32) + bqkv_ref[...], 0.0)  # (rows, 3n)

    def split_heads(col0):
        # Column band (rows, n) -> (num_heads*bs, seq, head_dim), head-major along
        # the leading axis (same layout PyTorch builds with cat(split(., dim=2))).
        # Leading-axis concat of sublane-split reshapes: no cross-lane shuffles.
        return jnp.concatenate(
            [qkv[:, col0 + h * head_dim: col0 + (h + 1) * head_dim]
             .reshape(bs, seq, head_dim) for h in range(num_heads)], axis=0)

    q = split_heads(0)
    k = split_heads(n)
    v = split_heads(2 * n)

    # ONE batched score matmul over all (head, batch) pairs; contraction over the
    # head dim directly (no K transpose emitted).
    s = jnp.einsum("gqd,gkd->gqk", q.astype(matmul_dtype), k.astype(matmul_dtype),
                   preferred_element_type=jnp.float32) * scale   # (nh*bs, seq, seq)
    m = jnp.max(s, axis=-1, keepdims=True)
    e = jnp.exp(s - m)
    # Reciprocal on the EUP slot instead of a VALU divide.
    p = e * pl.reciprocal(jnp.sum(e, axis=-1, keepdims=True), approx=True)
    # TODO(synk): nn.Dropout(p=0.1) on the attention probs is identity here.
    o = jnp.einsum("gqk,gkd->gqd", p.astype(matmul_dtype), v.astype(matmul_dtype),
                   preferred_element_type=jnp.float32)           # (nh*bs, seq, hd)

    # Rebuild (rows, n): leading-axis split per head, single lane concat.
    att = jnp.concatenate(
        [o[h * bs:(h + 1) * bs].reshape(rows, head_dim) for h in range(num_heads)],
        axis=-1)

    x = _batchnorm(att + x, gatt_ref[...], batt_ref[...], rows)

    # -------------------- Feed-forward --------------------
    h1 = jnp.maximum(
        jnp.dot(x.astype(matmul_dtype), w1_ref[...].astype(matmul_dtype),
                preferred_element_type=jnp.float32) + b1_ref[...], 0.0)
    y = jnp.dot(h1.astype(matmul_dtype), w2_ref[...].astype(matmul_dtype),
                preferred_element_type=jnp.float32) + b2_ref[...]
    x = _batchnorm(y + x, gff_ref[...], bff_ref[...], rows)

    x_carry[...] = x

    @pl.when(layer == pl.num_programs(0) - 1)
    def _():
        o_ref[...] = x


# ----------------------------------------------------------------------------
# Wrapper: one pallas_call, grid over layers, per-layer weight blocks
# ----------------------------------------------------------------------------
def encoder_forward(x, params, *, num_heads, matmul_dtype=jnp.float32):
    """x: [batch, seq, hidden] -> [batch, seq, hidden]"""
    bs, seq, n = x.shape
    num_layers = params["wqkv"].shape[0]
    head_dim = n // num_heads
    x2d = x.reshape(bs * seq, n).astype(jnp.float32)

    kern = functools.partial(_encoder_layer_kernel, bs=bs, seq=seq,
                             num_heads=num_heads, head_dim=head_dim,
                             matmul_dtype=matmul_dtype)

    def layer_spec(shape):
        # Stacked (L, a, b) parameter -> per-grid-step (a, b) block (layer squeezed).
        return pl.BlockSpec((pl.Squeezed(),) + tuple(shape[1:]),
                            lambda l: (l, 0, 0))

    def resident_spec(shape):
        # Full-array block, same index every grid step (stays resident in VMEM).
        return pl.BlockSpec(tuple(shape), lambda l: (0,) * len(shape))

    args = (x2d,) + tuple(params[k] for k in _PARAM_ORDER)
    in_specs = ([resident_spec(x2d.shape)]
                + [layer_spec(params[k].shape) for k in _PARAM_ORDER])

    # Explicit VMEM budget: double-buffered per-layer weights + activation blocks
    # + carry scratch + headroom.  Floor at 16 MiB (v5e scoped default), cap at
    # 64 MiB (v7x physical per TC).
    itemsize = 4
    per_layer_param_bytes = sum(
        math.prod(params[k].shape[1:]) * itemsize for k in _PARAM_ORDER)
    act_bytes = bs * seq * n * itemsize
    vmem_limit = (2 * per_layer_param_bytes   # double-buffered weight tiles
                  + 2 * act_bytes             # input block (double-buffered)
                  + 2 * act_bytes             # output block
                  + act_bytes                 # carry scratch
                  + (2 << 20))                # compiler temporaries headroom
    vmem_limit = int(min(max(vmem_limit, 16 << 20), 64 << 20))

    out2d = pl.pallas_call(
        kern,
        grid=(num_layers,),
        in_specs=in_specs,
        out_specs=resident_spec(x2d.shape),
        out_shape=jax.ShapeDtypeStruct(x2d.shape, jnp.float32),
        scratch_shapes=[pltpu.VMEM((bs * seq, n), jnp.float32)],
        compiler_params=pltpu.CompilerParams(
            dimension_semantics=("arbitrary",),   # layer axis carries a dependence
            vmem_limit_bytes=vmem_limit),
    )(*args)
    return out2d.reshape(bs, seq, n)


# ----------------------------------------------------------------------------
# Deterministic parameter init (weights stored pre-transposed: [in, out];
# per-type weights stacked across layers along a leading layer axis)
# ----------------------------------------------------------------------------
def init_params(key, num_layers, n_hidden, ff_hidden):
    p = {k: [] for k in _PARAM_ORDER}
    for _ in range(num_layers):
        key, *ks = jax.random.split(key, 15)
        wq = jax.random.normal(ks[0], (n_hidden, n_hidden), jnp.float32) * 0.05
        wk = jax.random.normal(ks[1], (n_hidden, n_hidden), jnp.float32) * 0.05
        wv = jax.random.normal(ks[2], (n_hidden, n_hidden), jnp.float32) * 0.05
        bq = jax.random.normal(ks[3], (1, n_hidden), jnp.float32) * 0.01
        bk = jax.random.normal(ks[4], (1, n_hidden), jnp.float32) * 0.01
        bv = jax.random.normal(ks[5], (1, n_hidden), jnp.float32) * 0.01
        p["wqkv"].append(jnp.concatenate([wq, wk, wv], axis=1))
        p["bqkv"].append(jnp.concatenate([bq, bk, bv], axis=1))
        p["gatt"].append(1.0 + jax.random.normal(ks[6], (1, n_hidden), jnp.float32) * 0.01)
        p["batt"].append(jax.random.normal(ks[7], (1, n_hidden), jnp.float32) * 0.01)
        p["w1"].append(jax.random.normal(ks[8], (n_hidden, ff_hidden), jnp.float32) * 0.05)
        p["b1"].append(jax.random.normal(ks[9], (1, ff_hidden), jnp.float32) * 0.01)
        p["w2"].append(jax.random.normal(ks[10], (ff_hidden, n_hidden), jnp.float32) * 0.05)
        p["b2"].append(jax.random.normal(ks[11], (1, n_hidden), jnp.float32) * 0.01)
        p["gff"].append(1.0 + jax.random.normal(ks[12], (1, n_hidden), jnp.float32) * 0.01)
        p["bff"].append(jax.random.normal(ks[13], (1, n_hidden), jnp.float32) * 0.01)
    return {k: jnp.stack(v, axis=0) for k, v in p.items()}


# ----------------------------------------------------------------------------
# Pure-JAX reference (same math, different formulation) for a correctness check
# ----------------------------------------------------------------------------
def _ref_forward(x, params, *, num_heads):
    bs, seq, n = x.shape
    hd = n // num_heads
    num_layers = params["wqkv"].shape[0]

    def bn(r, g, b):
        mean = r.mean(axis=(0, 1), keepdims=True)
        var = ((r - mean) ** 2).mean(axis=(0, 1), keepdims=True)
        return (r - mean) / jnp.sqrt(var + EPS) * g[None] + b[None]

    for l in range(num_layers):
        wqkv, bqkv = params["wqkv"][l], params["bqkv"][l]
        wq, wk, wv = wqkv[:, :n], wqkv[:, n:2 * n], wqkv[:, 2 * n:]
        bq, bk, bv = bqkv[:, :n], bqkv[:, n:2 * n], bqkv[:, 2 * n:]
        q = jax.nn.relu(x @ wq + bq[None])
        k = jax.nn.relu(x @ wk + bk[None])
        v = jax.nn.relu(x @ wv + bv[None])
        qh = q.reshape(bs, seq, num_heads, hd)
        kh = k.reshape(bs, seq, num_heads, hd)
        vh = v.reshape(bs, seq, num_heads, hd)
        s = jnp.einsum("bqhd,bkhd->bhqk", qh, kh) / math.sqrt(hd)
        p = jax.nn.softmax(s, axis=-1)
        o = jnp.einsum("bhqk,bkhd->bqhd", p, vh).reshape(bs, seq, n)
        x = bn(o + x, params["gatt"][l], params["batt"][l])

        h = jax.nn.relu(x @ params["w1"][l] + params["b1"][l][None])
        y = h @ params["w2"][l] + params["b2"][l][None]
        x = bn(y + x, params["gff"][l], params["bff"][l])
    return x


if __name__ == "__main__":
    # Small, consistent shapes: batch=2, seq=8, n_hidden=32, ff_hidden=64,
    # num_heads=4 (32 % 4 == 0), num_layers=3.
    bs, seq, n_hidden, ff_hidden, num_heads, num_layers = 2, 8, 32, 64, 4, 3

    key = jax.random.PRNGKey(0)
    key, xkey = jax.random.split(key)
    x = jax.random.normal(xkey, (bs, seq, n_hidden), jnp.float32)
    params = init_params(key, num_layers, n_hidden, ff_hidden)

    out = encoder_forward(x, params, num_heads=num_heads)
    out = jax.block_until_ready(out)

    ref = _ref_forward(x, params, num_heads=num_heads)
    assert out.shape == (bs, seq, n_hidden)
    # Tolerance loosened from 1e-4 -> 5e-3 because the softmax denominator uses the
    # EUP approximate reciprocal (as per the performance review); observed drift is
    # ~1e-3-level against the exact-divide f32 reference.
    assert jnp.allclose(out, ref, atol=5e-3, rtol=5e-3), "mismatch vs JAX reference"

    print("KERNEL_OK")
</pallas_src>

<mosaic_0001>
module attributes {stable_mosaic.version = 11 : i64} {
  func.func @_encoder_layer_kernel(%arg0: i32, %arg1: memref<16x32xf32, #tpu.memory_space<vmem>>, %arg2: memref<1x32x96xf32, #tpu.memory_space<vmem>>, %arg3: memref<1x1x96xf32, #tpu.memory_space<vmem>>, %arg4: memref<1x1x32xf32, #tpu.memory_space<vmem>>, %arg5: memref<1x1x32xf32, #tpu.memory_space<vmem>>, %arg6: memref<1x32x64xf32, #tpu.memory_space<vmem>>, %arg7: memref<1x1x64xf32, #tpu.memory_space<vmem>>, %arg8: memref<1x64x32xf32, #tpu.memory_space<vmem>>, %arg9: memref<1x1x32xf32, #tpu.memory_space<vmem>>, %arg10: memref<1x1x32xf32, #tpu.memory_space<vmem>>, %arg11: memref<1x1x32xf32, #tpu.memory_space<vmem>>, %arg12: memref<16x32xf32, #tpu.memory_space<vmem>>, %arg13: memref<16x32xf32, #tpu.memory_space<vmem>>) attributes {dimension_semantics = [#tpu.dimension_semantics<arbitrary>], iteration_bounds = array<i64: 3>, scalar_prefetch = 0 : i64, scratch_operands = 1 : i64, tpu.core_type = #tpu.core_type<tc>, window_params = [{pipeline_mode = #tpu.pipeline_mode<synchronous>, transform_indices = @transform_0, window_bounds = array<i64: 16, 32>}, {transform_indices = @transform_1, window_bounds = array<i64: 1, 32, 96>}, {transform_indices = @transform_2, window_bounds = array<i64: 1, 1, 96>}, {transform_indices = @transform_3, window_bounds = array<i64: 1, 1, 32>}, {transform_indices = @transform_4, window_bounds = array<i64: 1, 1, 32>}, {transform_indices = @transform_5, window_bounds = array<i64: 1, 32, 64>}, {transform_indices = @transform_6, window_bounds = array<i64: 1, 1, 64>}, {transform_indices = @transform_7, window_bounds = array<i64: 1, 64, 32>}, {transform_indices = @transform_8, window_bounds = array<i64: 1, 1, 32>}, {transform_indices = @transform_9, window_bounds = array<i64: 1, 1, 32>}, {transform_indices = @transform_10, window_bounds = array<i64: 1, 1, 32>}, {pipeline_mode = #tpu.pipeline_mode<synchronous>, transform_indices = @transform_11, window_bounds = array<i64: 16, 32>}]} {
    %c0_i32 = arith.constant 0 : i32
    %0 = arith.cmpi eq, %arg0, %c0_i32 : i32
    %1 = arith.extui %0 : i1 to i32
    %c0_i32_0 = arith.constant 0 : i32
    %2 = arith.cmpi ne, %1, %c0_i32_0 : i32
    scf.if %2 {
      %c0_54 = arith.constant 0 : index
      %c0_55 = arith.constant 0 : index
      %137 = vector.load %arg1[%c0_54, %c0_55] : memref<16x32xf32, #tpu.memory_space<vmem>>, vector<16x32xf32>
      %c0_56 = arith.constant 0 : index
      %c0_57 = arith.constant 0 : index
      %138 = vector.load %arg13[%c0_56, %c0_57] : memref<16x32xf32, #tpu.memory_space<vmem>>, vector<16x32xf32>
      tpu.vector_store %arg13[%c0_56, %c0_57], %137 {strides = array<i32>} : memref<16x32xf32, #tpu.memory_space<vmem>>, vector<16x32xf32>,
    } else {
    }
    %c0 = arith.constant 0 : index
    %c0_1 = arith.constant 0 : index
    %3 = vector.load %arg13[%c0, %c0_1] : memref<16x32xf32, #tpu.memory_space<vmem>>, vector<16x32xf32>
    %c0_2 = arith.constant 0 : index
    %c0_3 = arith.constant 0 : index
    %c0_4 = arith.constant 0 : index
    %4 = vector.load %arg2[%c0_2, %c0_3, %c0_4] : memref<1x32x96xf32, #tpu.memory_space<vmem>>, vector<1x32x96xf32>
    %5 = vector.shape_cast %4 : vector<1x32x96xf32> to vector<32x96xf32>
    %cst = arith.constant dense<0.000000e+00> : vector<16x96xf32>
    %6 = tpu.matmul %3, %5, %cst {dimension_numbers = #tpu.dot_dimension_numbers<[1], [0], [0], [1], [0, 0, 1, 1], [], []>} : vector<16x32xf32>, vector<32x96xf32>, vector<16x96xf32> -> vector<16x96xf32>
    %c0_5 = arith.constant 0 : index
    %c0_6 = arith.constant 0 : index
    %c0_7 = arith.constant 0 : index
    %7 = vector.load %arg3[%c0_5, %c0_6, %c0_7] : memref<1x1x96xf32, #tpu.memory_space<vmem>>, vector<1x1x96xf32>
    %8 = vector.shape_cast %7 : vector<1x1x96xf32> to vector<1x96xf32>
    %9 = vector.broadcast %8 : vector<1x96xf32> to vector<16x96xf32>
    %10 = arith.addf %6, %9 : vector<16x96xf32>
    %cst_8 = arith.constant 0.000000e+00 : f32
    %11 = vector.broadcast %cst_8 : f32 to vector<16x96xf32>
    %12 = arith.maximumf %10, %11 : vector<16x96xf32>
    %13 = vector.extract_strided_slice %12 {offsets = [0, 0], sizes = [16, 8], strides = [1, 1]} : vector<16x96xf32> to vector<16x8xf32>
    %14 = vector.shape_cast %13 : vector<16x8xf32> to vector<2x8x8xf32>
    %15 = vector.extract_strided_slice %12 {offsets = [0, 8], sizes = [16, 8], strides = [1, 1]} : vector<16x96xf32> to vector<16x8xf32>
    %16 = vector.shape_cast %15 : vector<16x8xf32> to vector<2x8x8xf32>
    %17 = vector.extract_strided_slice %12 {offsets = [0, 16], sizes = [16, 8], strides = [1, 1]} : vector<16x96xf32> to vector<16x8xf32>
    %18 = vector.shape_cast %17 : vector<16x8xf32> to vector<2x8x8xf32>
    %19 = vector.extract_strided_slice %12 {offsets = [0, 24], sizes = [16, 8], strides = [1, 1]} : vector<16x96xf32> to vector<16x8xf32>
    %20 = vector.shape_cast %19 : vector<16x8xf32> to vector<2x8x8xf32>
    %21 = tpu.concatenate %14, %16, %18, %20 in 0 : vector<2x8x8xf32>, vector<2x8x8xf32>, vector<2x8x8xf32>, vector<2x8x8xf32> -> vector<8x8x8xf32>
    %22 = vector.extract_strided_slice %12 {offsets = [0, 32], sizes = [16, 8], strides = [1, 1]} : vector<16x96xf32> to vector<16x8xf32>
    %23 = vector.shape_cast %22 : vector<16x8xf32> to vector<2x8x8xf32>
    %24 = vector.extract_strided_slice %12 {offsets = [0, 40], sizes = [16, 8], strides = [1, 1]} : vector<16x96xf32> to vector<16x8xf32>
    %25 = vector.shape_cast %24 : vector<16x8xf32> to vector<2x8x8xf32>
    %26 = vector.extract_strided_slice %12 {offsets = [0, 48], sizes = [16, 8], strides = [1, 1]} : vector<16x96xf32> to vector<16x8xf32>
    %27 = vector.shape_cast %26 : vector<16x8xf32> to vector<2x8x8xf32>
    %28 = vector.extract_strided_slice %12 {offsets = [0, 56], sizes = [16, 8], strides = [1, 1]} : vector<16x96xf32> to vector<16x8xf32>
    %29 = vector.shape_cast %28 : vector<16x8xf32> to vector<2x8x8xf32>
    %30 = tpu.concatenate %23, %25, %27, %29 in 0 : vector<2x8x8xf32>, vector<2x8x8xf32>, vector<2x8x8xf32>, vector<2x8x8xf32> -> vector<8x8x8xf32>
    %31 = vector.extract_strided_slice %12 {offsets = [0, 64], sizes = [16, 8], strides = [1, 1]} : vector<16x96xf32> to vector<16x8xf32>
    %32 = vector.shape_cast %31 : vector<16x8xf32> to vector<2x8x8xf32>
    %33 = vector.extract_strided_slice %12 {offsets = [0, 72], sizes = [16, 8], strides = [1, 1]} : vector<16x96xf32> to vector<16x8xf32>
    %34 = vector.shape_cast %33 : vector<16x8xf32> to vector<2x8x8xf32>
    %35 = vector.extract_strided_slice %12 {offsets = [0, 80], sizes = [16, 8], strides = [1, 1]} : vector<16x96xf32> to vector<16x8xf32>
    %36 = vector.shape_cast %35 : vector<16x8xf32> to vector<2x8x8xf32>
    %37 = vector.extract_strided_slice %12 {offsets = [0, 88], sizes = [16, 8], strides = [1, 1]} : vector<16x96xf32> to vector<16x8xf32>
    %38 = vector.shape_cast %37 : vector<16x8xf32> to vector<2x8x8xf32>
    %39 = tpu.concatenate %32, %34, %36, %38 in 0 : vector<2x8x8xf32>, vector<2x8x8xf32>, vector<2x8x8xf32>, vector<2x8x8xf32> -> vector<8x8x8xf32>
    "tpu.trace_start"() <{level = 10 : i32, message = "gqd,gkd->gqk"}> : () -> ()
    %cst_9 = arith.constant dense<0.000000e+00> : vector<8x8x8xf32>
    %40 = tpu.matmul %21, %30, %cst_9 {dimension_numbers = #tpu.dot_dimension_numbers<[2], [2], [1], [1], [0, 0, 0, 1, 1, 1], [0], [0]>} : vector<8x8x8xf32>, vector<8x8x8xf32>, vector<8x8x8xf32> -> vector<8x8x8xf32>
    "tpu.trace_stop"() : () -> ()
    %cst_10 = arith.constant 0.353553385 : f32
    %41 = vector.broadcast %cst_10 : f32 to vector<8x8x8xf32>
    %42 = arith.mulf %40, %41 : vector<8x8x8xf32>
    %cst_11 = arith.constant dense<0xFF800000> : vector<8x8xf32>
    %43 = vector.multi_reduction <maximumf>, %42, %cst_11 [2] : vector<8x8x8xf32> to vector<8x8xf32>
    %44 = vector.shape_cast %43 : vector<8x8xf32> to vector<8x8x1xf32>
    %45 = vector.broadcast %44 : vector<8x8x1xf32> to vector<8x8x8xf32>
    %46 = arith.subf %42, %45 : vector<8x8x8xf32>
    %47 = math.exp %46 : vector<8x8x8xf32>
    %cst_12 = arith.constant dense<0.000000e+00> : vector<8x8xf32>
    %48 = vector.multi_reduction <add>, %47, %cst_12 [2] : vector<8x8x8xf32> to vector<8x8xf32>
    %49 = vector.shape_cast %48 : vector<8x8xf32> to vector<8x8x1xf32>
    %50 = tpu.reciprocal %49 {approx = true} : vector<8x8x1xf32> -> vector<8x8x1xf32>
    %51 = vector.broadcast %50 : vector<8x8x1xf32> to vector<8x8x8xf32>
    %52 = arith.mulf %47, %51 : vector<8x8x8xf32>
    "tpu.trace_start"() <{level = 10 : i32, message = "gqk,gkd->gqd"}> : () -> ()
    %cst_13 = arith.constant dense<0.000000e+00> : vector<8x8x8xf32>
    %53 = tpu.matmul %52, %39, %cst_13 {dimension_numbers = #tpu.dot_dimension_numbers<[2], [1], [1], [2], [0, 0, 0, 1, 1, 2], [0], [0]>} : vector<8x8x8xf32>, vector<8x8x8xf32>, vector<8x8x8xf32> -> vector<8x8x8xf32>
    "tpu.trace_stop"() : () -> ()
    %54 = vector.extract_strided_slice %53 {offsets = [0, 0, 0], sizes = [2, 8, 8], strides = [1, 1, 1]} : vector<8x8x8xf32> to vector<2x8x8xf32>
    %55 = vector.shape_cast %54 : vector<2x8x8xf32> to vector<16x8xf32>
    %56 = vector.extract_strided_slice %53 {offsets = [2, 0, 0], sizes = [2, 8, 8], strides = [1, 1, 1]} : vector<8x8x8xf32> to vector<2x8x8xf32>
    %57 = vector.shape_cast %56 : vector<2x8x8xf32> to vector<16x8xf32>
    %58 = vector.extract_strided_slice %53 {offsets = [4, 0, 0], sizes = [2, 8, 8], strides = [1, 1, 1]} : vector<8x8x8xf32> to vector<2x8x8xf32>
    %59 = vector.shape_cast %58 : vector<2x8x8xf32> to vector<16x8xf32>
    %60 = vector.extract_strided_slice %53 {offsets = [6, 0, 0], sizes = [2, 8, 8], strides = [1, 1, 1]} : vector<8x8x8xf32> to vector<2x8x8xf32>
    %61 = vector.shape_cast %60 : vector<2x8x8xf32> to vector<16x8xf32>
    %62 = tpu.concatenate %55, %57, %59, %61 in 1 : vector<16x8xf32>, vector<16x8xf32>, vector<16x8xf32>, vector<16x8xf32> -> vector<16x32xf32>
    %63 = arith.addf %62, %3 : vector<16x32xf32>
    %c0_14 = arith.constant 0 : index
    %c0_15 = arith.constant 0 : index
    %c0_16 = arith.constant 0 : index
    %64 = vector.load %arg4[%c0_14, %c0_15, %c0_16] : memref<1x1x32xf32, #tpu.memory_space<vmem>>, vector<1x1x32xf32>
    %65 = vector.shape_cast %64 : vector<1x1x32xf32> to vector<1x32xf32>
    %c0_17 = arith.constant 0 : index
    %c0_18 = arith.constant 0 : index
    %c0_19 = arith.constant 0 : index
    %66 = vector.load %arg5[%c0_17, %c0_18, %c0_19] : memref<1x1x32xf32, #tpu.memory_space<vmem>>, vector<1x1x32xf32>
    %67 = vector.shape_cast %66 : vector<1x1x32xf32> to vector<1x32xf32>
    %cst_20 = arith.constant dense<0.000000e+00> : vector<32xf32>
    %68 = vector.multi_reduction <add>, %63, %cst_20 [0] : vector<16x32xf32> to vector<32xf32>
    %69 = vector.shape_cast %68 : vector<32xf32> to vector<1x32xf32>
    %cst_21 = arith.constant 6.250000e-02 : f32
    %70 = vector.broadcast %cst_21 : f32 to vector<1x32xf32>
    %71 = arith.mulf %69, %70 : vector<1x32xf32>
    %72 = arith.mulf %63, %63 : vector<16x32xf32>
    %cst_22 = arith.constant dense<0.000000e+00> : vector<32xf32>
    %73 = vector.multi_reduction <add>, %72, %cst_22 [0] : vector<16x32xf32> to vector<32xf32>
    %74 = vector.shape_cast %73 : vector<32xf32> to vector<1x32xf32>
    %cst_23 = arith.constant 6.250000e-02 : f32
    %75 = vector.broadcast %cst_23 : f32 to vector<1x32xf32>
    %76 = arith.mulf %74, %75 : vector<1x32xf32>
    %77 = arith.mulf %71, %71 : vector<1x32xf32>
    %78 = arith.subf %76, %77 : vector<1x32xf32>
    %79 = vector.broadcast %71 : vector<1x32xf32> to vector<16x32xf32>
    %80 = arith.subf %63, %79 : vector<16x32xf32>
    %cst_24 = arith.constant 1.000000e-03 : f32
    %81 = vector.broadcast %cst_24 : f32 to vector<1x32xf32>
    %82 = arith.addf %78, %81 : vector<1x32xf32>
    %83 = math.rsqrt %82 : vector<1x32xf32>
    %84 = vector.broadcast %83 : vector<1x32xf32> to vector<16x32xf32>
    %85 = arith.mulf %80, %84 : vector<16x32xf32>
    %86 = vector.broadcast %65 : vector<1x32xf32> to vector<16x32xf32>
    %87 = arith.mulf %85, %86 : vector<16x32xf32>
    %88 = vector.broadcast %67 : vector<1x32xf32> to vector<16x32xf32>
    %89 = arith.addf %87, %88 : vector<16x32xf32>
    %c0_25 = arith.constant 0 : index
    %c0_26 = arith.constant 0 : index
    %c0_27 = arith.constant 0 : index
    %90 = vector.load %arg6[%c0_25, %c0_26, %c0_27] : memref<1x32x64xf32, #tpu.memory_space<vmem>>, vector<1x32x64xf32>
    %91 = vector.shape_cast %90 : vector<1x32x64xf32> to vector<32x64xf32>
    %cst_28 = arith.constant dense<0.000000e+00> : vector<16x64xf32>
    %92 = tpu.matmul %89, %91, %cst_28 {dimension_numbers = #tpu.dot_dimension_numbers<[1], [0], [0], [1], [0, 0, 1, 1], [], []>} : vector<16x32xf32>, vector<32x64xf32>, vector<16x64xf32> -> vector<16x64xf32>
    %c0_29 = arith.constant 0 : index
    %c0_30 = arith.constant 0 : index
    %c0_31 = arith.constant 0 : index
    %93 = vector.load %arg7[%c0_29, %c0_30, %c0_31] : memref<1x1x64xf32, #tpu.memory_space<vmem>>, vector<1x1x64xf32>
    %94 = vector.shape_cast %93 : vector<1x1x64xf32> to vector<1x64xf32>
    %95 = vector.broadcast %94 : vector<1x64xf32> to vector<16x64xf32>
    %96 = arith.addf %92, %95 : vector<16x64xf32>
    %cst_32 = arith.constant 0.000000e+00 : f32
    %97 = vector.broadcast %cst_32 : f32 to vector<16x64xf32>
    %98 = arith.maximumf %96, %97 : vector<16x64xf32>
    %c0_33 = arith.constant 0 : index
    %c0_34 = arith.constant 0 : index
    %c0_35 = arith.constant 0 : index
    %99 = vector.load %arg8[%c0_33, %c0_34, %c0_35] : memref<1x64x32xf32, #tpu.memory_space<vmem>>, vector<1x64x32xf32>
    %100 = vector.shape_cast %99 : vector<1x64x32xf32> to vector<64x32xf32>
    %cst_36 = arith.constant dense<0.000000e+00> : vector<16x32xf32>
    %101 = tpu.matmul %98, %100, %cst_36 {dimension_numbers = #tpu.dot_dimension_numbers<[1], [0], [0], [1], [0, 0, 1, 1], [], []>} : vector<16x64xf32>, vector<64x32xf32>, vector<16x32xf32> -> vector<16x32xf32>
    %c0_37 = arith.constant 0 : index
    %c0_38 = arith.constant 0 : index
    %c0_39 = arith.constant 0 : index
    %102 = vector.load %arg9[%c0_37, %c0_38, %c0_39] : memref<1x1x32xf32, #tpu.memory_space<vmem>>, vector<1x1x32xf32>
    %103 = vector.shape_cast %102 : vector<1x1x32xf32> to vector<1x32xf32>
    %104 = vector.broadcast %103 : vector<1x32xf32> to vector<16x32xf32>
    %105 = arith.addf %101, %104 : vector<16x32xf32>
    %106 = arith.addf %105, %89 : vector<16x32xf32>
    %c0_40 = arith.constant 0 : index
    %c0_41 = arith.constant 0 : index
    %c0_42 = arith.constant 0 : index
    %107 = vector.load %arg10[%c0_40, %c0_41, %c0_42] : memref<1x1x32xf32, #tpu.memory_space<vmem>>, vector<1x1x32xf32>
    %108 = vector.shape_cast %107 : vector<1x1x32xf32> to vector<1x32xf32>
    %c0_43 = arith.constant 0 : index
    %c0_44 = arith.constant 0 : index
    %c0_45 = arith.constant 0 : index
    %109 = vector.load %arg11[%c0_43, %c0_44, %c0_45] : memref<1x1x32xf32, #tpu.memory_space<vmem>>, vector<1x1x32xf32>
    %110 = vector.shape_cast %109 : vector<1x1x32xf32> to vector<1x32xf32>
    %cst_46 = arith.constant dense<0.000000e+00> : vector<32xf32>
    %111 = vector.multi_reduction <add>, %106, %cst_46 [0] : vector<16x32xf32> to vector<32xf32>
    %112 = vector.shape_cast %111 : vector<32xf32> to vector<1x32xf32>
    %cst_47 = arith.constant 6.250000e-02 : f32
    %113 = vector.broadcast %cst_47 : f32 to vector<1x32xf32>
    %114 = arith.mulf %112, %113 : vector<1x32xf32>
    %115 = arith.mulf %106, %106 : vector<16x32xf32>
    %cst_48 = arith.constant dense<0.000000e+00> : vector<32xf32>
    %116 = vector.multi_reduction <add>, %115, %cst_48 [0] : vector<16x32xf32> to vector<32xf32>
    %117 = vector.shape_cast %116 : vector<32xf32> to vector<1x32xf32>
    %cst_49 = arith.constant 6.250000e-02 : f32
    %118 = vector.broadcast %cst_49 : f32 to vector<1x32xf32>
    %119 = arith.mulf %117, %118 : vector<1x32xf32>
    %120 = arith.mulf %114, %114 : vector<1x32xf32>
    %121 = arith.subf %119, %120 : vector<1x32xf32>
    %122 = vector.broadcast %114 : vector<1x32xf32> to vector<16x32xf32>
    %123 = arith.subf %106, %122 : vector<16x32xf32>
    %cst_50 = arith.constant 1.000000e-03 : f32
    %124 = vector.broadcast %cst_50 : f32 to vector<1x32xf32>
    %125 = arith.addf %121, %124 : vector<1x32xf32>
    %126 = math.rsqrt %125 : vector<1x32xf32>
    %127 = vector.broadcast %126 : vector<1x32xf32> to vector<16x32xf32>
    %128 = arith.mulf %123, %127 : vector<16x32xf32>
    %129 = vector.broadcast %108 : vector<1x32xf32> to vector<16x32xf32>
    %130 = arith.mulf %128, %129 : vector<16x32xf32>
    %131 = vector.broadcast %110 : vector<1x32xf32> to vector<16x32xf32>
    %132 = arith.addf %130, %131 : vector<16x32xf32>
    %c0_51 = arith.constant 0 : index
    %c0_52 = arith.constant 0 : index
    %133 = vector.load %arg13[%c0_51, %c0_52] : memref<16x32xf32, #tpu.memory_space<vmem>>, vector<16x32xf32>
    tpu.vector_store %arg13[%c0_51, %c0_52], %132 {strides = array<i32>} : memref<16x32xf32, #tpu.memory_space<vmem>>, vector<16x32xf32>,
    %c2_i32 = arith.constant 2 : i32
    %134 = arith.cmpi eq, %arg0, %c2_i32 : i32
    %135 = arith.extui %134 : i1 to i32
    %c0_i32_53 = arith.constant 0 : i32
    %136 = arith.cmpi ne, %135, %c0_i32_53 : i32
    scf.if %136 {
      %c0_54 = arith.constant 0 : index
      %c0_55 = arith.constant 0 : index
      %137 = vector.load %arg12[%c0_54, %c0_55] : memref<16x32xf32, #tpu.memory_space<vmem>>, vector<16x32xf32>
      tpu.vector_store %arg12[%c0_54, %c0_55], %132 {strides = array<i32>} : memref<16x32xf32, #tpu.memory_space<vmem>>, vector<16x32xf32>,
    } else {
    }
    return
  }
  func.func @transform_0(%arg0: i32) -> (i32, i32) {
    %c0_i32 = arith.constant 0 : i32
    %c0_i32_0 = arith.constant 0 : i32
    %c0_i32_1 = arith.constant 0 : i32
    return %c0_i32, %c0_i32_0 : i32, i32
  }
  func.func @transform_1(%arg0: i32) -> (i32, i32, i32) {
    %c0_i32 = arith.constant 0 : i32
    %c0_i32_0 = arith.constant 0 : i32
    %c0_i32_1 = arith.constant 0 : i32
    return %arg0, %c0_i32, %c0_i32_0 : i32, i32, i32
  }
  func.func @transform_2(%arg0: i32) -> (i32, i32, i32) {
    %c0_i32 = arith.constant 0 : i32
    %c0_i32_0 = arith.constant 0 : i32
    %c0_i32_1 = arith.constant 0 : i32
    return %arg0, %c0_i32, %c0_i32_0 : i32, i32, i32
  }
  func.func @transform_3(%arg0: i32) -> (i32, i32, i32) {
    %c0_i32 = arith.constant 0 : i32
    %c0_i32_0 = arith.constant 0 : i32
    %c0_i32_1 = arith.constant 0 : i32
    return %arg0, %c0_i32, %c0_i32_0 : i32, i32, i32
  }
  func.func @transform_4(%arg0: i32) -> (i32, i32, i32) {
    %c0_i32 = arith.constant 0 : i32
    %c0_i32_0 = arith.constant 0 : i32
    %c0_i32_1 = arith.constant 0 : i32
    return %arg0, %c0_i32, %c0_i32_0 : i32, i32, i32
  }
  func.func @transform_5(%arg0: i32) -> (i32, i32, i32) {
    %c0_i32 = arith.constant 0 : i32
    %c0_i32_0 = arith.constant 0 : i32
    %c0_i32_1 = arith.constant 0 : i32
    return %arg0, %c0_i32, %c0_i32_0 : i32, i32, i32
  }
  func.func @transform_6(%arg0: i32) -> (i32, i32, i32) {
    %c0_i32 = arith.constant 0 : i32
    %c0_i32_0 = arith.constant 0 : i32
    %c0_i32_1 = arith.constant 0 : i32
    return %arg0, %c0_i32, %c0_i32_0 : i32, i32, i32
  }
  func.func @transform_7(%arg0: i32) -> (i32, i32, i32) {
    %c0_i32 = arith.constant 0 : i32
    %c0_i32_0 = arith.constant 0 : i32
    %c0_i32_1 = arith.constant 0 : i32
    return %arg0, %c0_i32, %c0_i32_0 : i32, i32, i32
  }
  func.func @transform_8(%arg0: i32) -> (i32, i32, i32) {
    %c0_i32 = arith.constant 0 : i32
    %c0_i32_0 = arith.constant 0 : i32
    %c0_i32_1 = arith.constant 0 : i32
    return %arg0, %c0_i32, %c0_i32_0 : i32, i32, i32
  }
  func.func @transform_9(%arg0: i32) -> (i32, i32, i32) {
    %c0_i32 = arith.constant 0 : i32
    %c0_i32_0 = arith.constant 0 : i32
    %c0_i32_1 = arith.constant 0 : i32
    return %arg0, %c0_i32, %c0_i32_0 : i32, i32, i32
  }
  func.func @transform_10(%arg0: i32) -> (i32, i32, i32) {
    %c0_i32 = arith.constant 0 : i32
    %c0_i32_0 = arith.constant 0 : i32
    %c0_i32_1 = arith.constant 0 : i32
    return %arg0, %c0_i32, %c0_i32_0 : i32, i32, i32
  }
  func.func @transform_11(%arg0: i32) -> (i32, i32) {
    %c0_i32 = arith.constant 0 : i32
    %c0_i32_0 = arith.constant 0 : i32
    %c0_i32_1 = arith.constant 0 : i32
    return %c0_i32, %c0_i32_0 : i32, i32
  }
}

</mosaic_0001>

<llo_original>
// kernel: tpu_custom_call.1
$region0: #{tpu_custom_call.1}
  #allocation0 [shape = 'u32[]', space=smem, size = 0x4, offset = 0x4, fixed_abs, tag = 'smem constant byte address 0x4 - core index']
  #allocation1 [shape = 'u32[144,128]{1,0:T(1,128)}', space=vmem, size = 0x12000, scoped, tag = 'internal scratch']
  #allocation2 [shape = 'f32[16,32]{1,0:T(8,128)}', space=vmem, size = 0x2000, scoped, tag = 'scratch operand']
  %s0 = inlined_call_operand.vmem [shape: f32[16,32], index: 0, kind: input, shape index: {}]
  %s1 = inlined_call_operand.vmem [shape: f32[3,32,96], index: 1, kind: input, shape index: {}]
  %s2 = inlined_call_operand.vmem [shape: f32[3,1,96], index: 2, kind: input, shape index: {}]
  %s3 = inlined_call_operand.vmem [shape: f32[3,1,32], index: 3, kind: input, shape index: {}]
  %s4 = inlined_call_operand.vmem [shape: f32[3,1,32], index: 4, kind: input, shape index: {}]
  %s5 = inlined_call_operand.vmem [shape: f32[3,32,64], index: 5, kind: input, shape index: {}]
  %s6 = inlined_call_operand.vmem [shape: f32[3,1,64], index: 6, kind: input, shape index: {}]
  %s7 = inlined_call_operand.vmem [shape: f32[3,64,32], index: 7, kind: input, shape index: {}]
  %s8 = inlined_call_operand.vmem [shape: f32[3,1,32], index: 8, kind: input, shape index: {}]
  %s9 = inlined_call_operand.vmem [shape: f32[3,1,32], index: 9, kind: input, shape index: {}]
  %s10 = inlined_call_operand.vmem [shape: f32[3,1,32], index: 10, kind: input, shape index: {}]
  %s11 = inlined_call_operand.hbm [shape: f32[16,32], index: 11, kind: output, shape index: {}]
  %s12 = sld [smem:[#allocation0]]
  $region85: #{tpu_custom_call.1} parent=0
    _
  %s14 = ssub.s32 1, %s12
  %s15 = scalar_select 0, %s14, %s12
  $region1: #{tpu_custom_call.1} parent=0
    #allocation3 [shape = 'u8[8192]{0}', space=vmem, size = 0x2000, scoped, tag = 'output window, operand 0, single buffered']
    #allocation4 [shape = 's32[2]{0}', space=sflag, size = 0x8, scoped, tag = 'scoped memory for tpu_custom_call.1']
    %16 = vsyncpa [#allocation4], 0
    loop: start=0, step=1, limit=5
    $region2: #{tpu_custom_call.1} parent=1 // loop_pre_header
      _
    $region3: #{tpu_custom_call.1} parent=1 // loop_header
      %s18 = sphi 0, %s22
      %p19 = scmp.ge.s32.totalorder %s18, 5
      %s26 = sphi 0, %s26
      %s28 = sphi 0, %s26
      %s29 = sphi 0, %s28
      %s43 = sphi 0, %s29
      %s49 = sphi 0, %s51
      %s52 = sphi 0, %s49
      %s53 = sphi 0, %s52
      %s69 = sphi 0, %s53
      %s75 = sphi 0, %s77
      %s78 = sphi 0, %s75
      %s79 = sphi 0, %s78
      %s95 = sphi 0, %s79
      %s101 = sphi 0, %s103
      %s104 = sphi 0, %s101
      %s105 = sphi 0, %s104
      %s121 = sphi 0, %s105
      %s127 = sphi 0, %s129
      %s130 = sphi 0, %s127
      %s131 = sphi 0, %s130
      %s147 = sphi 0, %s131
      %s153 = sphi 0, %s155
      %s156 = sphi 0, %s153
      %s157 = sphi 0, %s156
      %s173 = sphi 0, %s157
      %s179 = sphi 0, %s181
      %s182 = sphi 0, %s179
      %s183 = sphi 0, %s182
      %s199 = sphi 0, %s183
      %s205 = sphi 0, %s207
      %s208 = sphi 0, %s205
      %s209 = sphi 0, %s208
      %s225 = sphi 0, %s209
      %s231 = sphi 0, %s233
      %s234 = sphi 0, %s231
      %s235 = sphi 0, %s234
      %s251 = sphi 0, %s235
      %s257 = sphi 0, %s259
      %s260 = sphi 0, %s257
      %s261 = sphi 0, %s260
      %s277 = sphi 0, %s261
      %s283 = sphi 0, %s285
      %s286 = sphi 0, %s283
      %s287 = sphi 0, %s286
      %s303 = sphi 0, %s287
      %s307 = sphi 0, %s307
      %s309 = sphi 0, %s307
      %s310 = sphi 0, %s309
      %s324 = sphi 0, %s310
    $region4: #{tpu_custom_call.1} parent=1 // loop_header_branch
      %21 = sbr.rel (%p19) target = $region8
    $region5: #{tpu_custom_call.1} parent=1 // loop_body
      %s23 = ssub.s32 %s18, 1
      %s24 = ssub.s32 %s18, 2
      %s25 = sadd.s32 %s18, 1
      %s27 = sadd.s32 %s26, 1
      %p30 = scmp.eq.s32.totalorder %s18, 2
      %p31 = scmp.ne.s32.totalorder %s26, %s28
      %p32 = scmp.eq.s32.totalorder %s18, 0
      %p33 = por %p31, %p32
      %p34 = scmp.ne.s32.totalorder %s26, %s28
      %p35 = scmp.eq.s32.totalorder %s23, 2
      %p36 = por %p34, %p35
      %p37 = scmp.ne.s32.totalorder %s28, %s29
      %p38 = scmp.eq.s32.totalorder %s23, 0
      %p39 = por %p37, %p38
      %p40 = scmp.ne.s32.totalorder %s28, %s29
      %p41 = scmp.eq.s32.totalorder %s24, 2
      %p42 = por %p40, %p41
      %p44 = scmp.ne.s32.totalorder %s29, %s43
      %p45 = scmp.eq.s32.totalorder %s24, 0
      %p46 = por %p44, %p45
      %s47 = ssub.s32 %s18, %s25
      %p48 = scmp.eq.s32.totalorder %s47, 0
      %s50 = sadd.s32 %s49, 1
      %s51 = scalar_select %p48, %s49, %s50
      %p54 = pneg %p48
      %p55 = scmp.eq.s32.totalorder %s18, 2
      %p56 = por %p54, %p55
      %p57 = scmp.ne.s32.totalorder %s49, %s52
      %p58 = scmp.eq.s32.totalorder %s18, 0
      %p59 = por %p57, %p58
      %p60 = scmp.ne.s32.totalorder %s49, %s52
      %p61 = scmp.eq.s32.totalorder %s23, 2
      %p62 = por %p60, %p61
      %p63 = scmp.ne.s32.totalorder %s52, %s53
      %p64 = scmp.eq.s32.totalorder %s23, 0
      %p65 = por %p63, %p64
      %p66 = scmp.ne.s32.totalorder %s52, %s53
      %p67 = scmp.eq.s32.totalorder %s24, 2
      %p68 = por %p66, %p67
      %p70 = scmp.ne.s32.totalorder %s53, %s69
      %p71 = scmp.eq.s32.totalorder %s24, 0
      %p72 = por %p70, %p71
      %s73 = ssub.s32 %s18, %s25
      %p74 = scmp.eq.s32.totalorder %s73, 0
      %s76 = sadd.s32 %s75, 1
      %s77 = scalar_select %p74, %s75, %s76
      %p80 = pneg %p74
      %p81 = scmp.eq.s32.totalorder %s18, 2
      %p82 = por %p80, %p81
      %p83 = scmp.ne.s32.totalorder %s75, %s78
      %p84 = scmp.eq.s32.totalorder %s18, 0
      %p85 = por %p83, %p84
      %p86 = scmp.ne.s32.totalorder %s75, %s78
      %p87 = scmp.eq.s32.totalorder %s23, 2
      %p88 = por %p86, %p87
      %p89 = scmp.ne.s32.totalorder %s78, %s79
      %p90 = scmp.eq.s32.totalorder %s23, 0
      %p91 = por %p89, %p90
      %p92 = scmp.ne.s32.totalorder %s78, %s79
      %p93 = scmp.eq.s32.totalorder %s24, 2
      %p94 = por %p92, %p93
      %p96 = scmp.ne.s32.totalorder %s79, %s95
      %p97 = scmp.eq.s32.totalorder %s24, 0
      %p98 = por %p96, %p97
      %s99 = ssub.s32 %s18, %s25
      %p100 = scmp.eq.s32.totalorder %s99, 0
      %s102 = sadd.s32 %s101, 1
      %s103 = scalar_select %p100, %s101, %s102
      %p106 = pneg %p100
      %p107 = scmp.eq.s32.totalorder %s18, 2
      %p108 = por %p106, %p107
      %p109 = scmp.ne.s32.totalorder %s101, %s104
      %p110 = scmp.eq.s32.totalorder %s18, 0
      %p111 = por %p109, %p110
      %p112 = scmp.ne.s32.totalorder %s101, %s104
      %p113 = scmp.eq.s32.totalorder %s23, 2
      %p114 = por %p112, %p113
      %p115 = scmp.ne.s32.totalorder %s104, %s105
      %p116 = scmp.eq.s32.totalorder %s23, 0
      %p117 = por %p115, %p116
      %p118 = scmp.ne.s32.totalorder %s104, %s105
      %p119 = scmp.eq.s32.totalorder %s24, 2
      %p120 = por %p118, %p119
      %p122 = scmp.ne.s32.totalorder %s105, %s121
      %p123 = scmp.eq.s32.totalorder %s24, 0
      %p124 = por %p122, %p123
      %s125 = ssub.s32 %s18, %s25
      %p126 = scmp.eq.s32.totalorder %s125, 0
      %s128 = sadd.s32 %s127, 1
      %s129 = scalar_select %p126, %s127, %s128
      %p132 = pneg %p126
      %p133 = scmp.eq.s32.totalorder %s18, 2
      %p134 = por %p132, %p133
      %p135 = scmp.ne.s32.totalorder %s127, %s130
      %p136 = scmp.eq.s32.totalorder %s18, 0
      %p137 = por %p135, %p136
      %p138 = scmp.ne.s32.totalorder %s127, %s130
      %p139 = scmp.eq.s32.totalorder %s23, 2
      %p140 = por %p138, %p139
      %p141 = scmp.ne.s32.totalorder %s130, %s131
      %p142 = scmp.eq.s32.totalorder %s23, 0
      %p143 = por %p141, %p142
      %p144 = scmp.ne.s32.totalorder %s130, %s131
      %p145 = scmp.eq.s32.totalorder %s24, 2
      %p146 = por %p144, %p145
      %p148 = scmp.ne.s32.totalorder %s131, %s147
      %p149 = scmp.eq.s32.totalorder %s24, 0
      %p150 = por %p148, %p149
      %s151 = ssub.s32 %s18, %s25
      %p152 = scmp.eq.s32.totalorder %s151, 0
      %s154 = sadd.s32 %s153, 1
      %s155 = scalar_select %p152, %s153, %s154
      %p158 = pneg %p152
      %p159 = scmp.eq.s32.totalorder %s18, 2
      %p160 = por %p158, %p159
      %p161 = scmp.ne.s32.totalorder %s153, %s156
      %p162 = scmp.eq.s32.totalorder %s18, 0
      %p163 = por %p161, %p162
      %p164 = scmp.ne.s32.totalorder %s153, %s156
      %p165 = scmp.eq.s32.totalorder %s23, 2
      %p166 = por %p164, %p165
      %p167 = scmp.ne.s32.totalorder %s156, %s157
      %p168 = scmp.eq.s32.totalorder %s23, 0
      %p169 = por %p167, %p168
      %p170 = scmp.ne.s32.totalorder %s156, %s157
      %p171 = scmp.eq.s32.totalorder %s24, 2
      %p172 = por %p170, %p171
      %p174 = scmp.ne.s32.totalorder %s157, %s173
      %p175 = scmp.eq.s32.totalorder %s24, 0
      %p176 = por %p174, %p175
      %s177 = ssub.s32 %s18, %s25
      %p178 = scmp.eq.s32.totalorder %s177, 0
      %s180 = sadd.s32 %s179, 1
      %s181 = scalar_select %p178, %s179, %s180
      %p184 = pneg %p178
      %p185 = scmp.eq.s32.totalorder %s18, 2
      %p186 = por %p184, %p185
      %p187 = scmp.ne.s32.totalorder %s179, %s182
      %p188 = scmp.eq.s32.totalorder %s18, 0
      %p189 = por %p187, %p188
      %p190 = scmp.ne.s32.totalorder %s179, %s182
      %p191 = scmp.eq.s32.totalorder %s23, 2
      %p192 = por %p190, %p191
      %p193 = scmp.ne.s32.totalorder %s182, %s183
      %p194 = scmp.eq.s32.totalorder %s23, 0
      %p195 = por %p193, %p194
      %p196 = scmp.ne.s32.totalorder %s182, %s183
      %p197 = scmp.eq.s32.totalorder %s24, 2
      %p198 = por %p196, %p197
      %p200 = scmp.ne.s32.totalorder %s183, %s199
      %p201 = scmp.eq.s32.totalorder %s24, 0
      %p202 = por %p200, %p201
      %s203 = ssub.s32 %s18, %s25
      %p204 = scmp.eq.s32.totalorder %s203, 0
      %s206 = sadd.s32 %s205, 1
      %s207 = scalar_select %p204, %s205, %s206
      %p210 = pneg %p204
      %p211 = scmp.eq.s32.totalorder %s18, 2
      %p212 = por %p210, %p211
      %p213 = scmp.ne.s32.totalorder %s205, %s208
      %p214 = scmp.eq.s32.totalorder %s18, 0
      %p215 = por %p213, %p214
      %p216 = scmp.ne.s32.totalorder %s205, %s208
      %p217 = scmp.eq.s32.totalorder %s23, 2
      %p218 = por %p216, %p217
      %p219 = scmp.ne.s32.totalorder %s208, %s209
      %p220 = scmp.eq.s32.totalorder %s23, 0
      %p221 = por %p219, %p220
      %p222 = scmp.ne.s32.totalorder %s208, %s209
      %p223 = scmp.eq.s32.totalorder %s24, 2
      %p224 = por %p222, %p223
      %p226 = scmp.ne.s32.totalorder %s209, %s225
      %p227 = scmp.eq.s32.totalorder %s24, 0
      %p228 = por %p226, %p227
      %s229 = ssub.s32 %s18, %s25
      %p230 = scmp.eq.s32.totalorder %s229, 0
      %s232 = sadd.s32 %s231, 1
      %s233 = scalar_select %p230, %s231, %s232
      %p236 = pneg %p230
      %p237 = scmp.eq.s32.totalorder %s18, 2
      %p238 = por %p236, %p237
      %p239 = scmp.ne.s32.totalorder %s231, %s234
      %p240 = scmp.eq.s32.totalorder %s18, 0
      %p241 = por %p239, %p240
      %p242 = scmp.ne.s32.totalorder %s231, %s234
      %p243 = scmp.eq.s32.totalorder %s23, 2
      %p244 = por %p242, %p243
      %p245 = scmp.ne.s32.totalorder %s234, %s235
      %p246 = scmp.eq.s32.totalorder %s23, 0
      %p247 = por %p245, %p246
      %p248 = scmp.ne.s32.totalorder %s234, %s235
      %p249 = scmp.eq.s32.totalorder %s24, 2
      %p250 = por %p248, %p249
      %p252 = scmp.ne.s32.totalorder %s235, %s251
      %p253 = scmp.eq.s32.totalorder %s24, 0
      %p254 = por %p252, %p253
      %s255 = ssub.s32 %s18, %s25
      %p256 = scmp.eq.s32.totalorder %s255, 0
      %s258 = sadd.s32 %s257, 1
      %s259 = scalar_select %p256, %s257, %s258
      %p262 = pneg %p256
      %p263 = scmp.eq.s32.totalorder %s18, 2
      %p264 = por %p262, %p263
      %p265 = scmp.ne.s32.totalorder %s257, %s260
      %p266 = scmp.eq.s32.totalorder %s18, 0
      %p267 = por %p265, %p266
      %p268 = scmp.ne.s32.totalorder %s257, %s260
      %p269 = scmp.eq.s32.totalorder %s23, 2
      %p270 = por %p268, %p269
      %p271 = scmp.ne.s32.totalorder %s260, %s261
      %p272 = scmp.eq.s32.totalorder %s23, 0
      %p273 = por %p271, %p272
      %p274 = scmp.ne.s32.totalorder %s260, %s261
      %p275 = scmp.eq.s32.totalorder %s24, 2
      %p276 = por %p274, %p275
      %p278 = scmp.ne.s32.totalorder %s261, %s277
      %p279 = scmp.eq.s32.totalorder %s24, 0
      %p280 = por %p278, %p279
      %s281 = ssub.s32 %s18, %s25
      %p282 = scmp.eq.s32.totalorder %s281, 0
      %s284 = sadd.s32 %s283, 1
      %s285 = scalar_select %p282, %s283, %s284
      %p288 = pneg %p282
      %p289 = scmp.eq.s32.totalorder %s18, 2
      %p290 = por %p288, %p289
      %p291 = scmp.ne.s32.totalorder %s283, %s286
      %p292 = scmp.eq.s32.totalorder %s18, 0
      %p293 = por %p291, %p292
      %p294 = scmp.ne.s32.totalorder %s283, %s286
      %p295 = scmp.eq.s32.totalorder %s23, 2
      %p296 = por %p294, %p295
      %p297 = scmp.ne.s32.totalorder %s286, %s287
      %p298 = scmp.eq.s32.totalorder %s23, 0
      %p299 = por %p297, %p298
      %p300 = scmp.ne.s32.totalorder %s286, %s287
      %p301 = scmp.eq.s32.totalorder %s24, 2
      %p302 = por %p300, %p301
      %p304 = scmp.ne.s32.totalorder %s287, %s303
      %p305 = scmp.eq.s32.totalorder %s24, 0
      %p306 = por %p304, %p305
      %s308 = sadd.s32 %s307, 1
      %p311 = scmp.eq.s32.totalorder %s18, 2
      %p312 = scmp.ne.s32.totalorder %s307, %s309
      %p313 = scmp.eq.s32.totalorder %s18, 0
      %p314 = por %p312, %p313
      %p315 = scmp.ne.s32.totalorder %s307, %s309
      %p316 = scmp.eq.s32.totalorder %s23, 2
      %p317 = por %p315, %p316
      %p318 = scmp.ne.s32.totalorder %s309, %s310
      %p319 = scmp.eq.s32.totalorder %s23, 0
      %p320 = por %p318, %p319
      %p321 = scmp.ne.s32.totalorder %s309, %s310
      %p322 = scmp.eq.s32.totalorder %s24, 2
      %p323 = por %p321, %p322
      %p325 = scmp.ne.s32.totalorder %s310, %s324
      %p326 = scmp.eq.s32.totalorder %s24, 0
      %p327 = por %p325, %p326
      %p328 = scmp.le.s32.totalorder 1, %s18
      %p329 = scmp.lt.s32.totalorder %s18, 4
      %p330 = pnand %p328, %p329
      %p331 = pneg %p330
      // Predicated region
      $region9: #{tpu_custom_call.1} parent=5 // pred_check
        _
      $region10: #{tpu_custom_call.1} parent=5 // pred_check_branch
        %333 = sbr.rel (%p330) target = $region12
      $region11: #{tpu_custom_call.1} parent=5 // pred_region
        %s334 = ssub.s32 %s18, 1
        // Predicated region
        $region13: #{tpu_custom_call.1} parent=11 // pred_check
          %p335 = pneg %p39
        $region14: #{tpu_custom_call.1} parent=11 // pred_check_branch
          %337 = sbr.rel (%p335) target = $region16
        $region15: #{tpu_custom_call.1} parent=11 // pred_region
          _
        $region16: #{tpu_custom_call.1} parent=11 // pred_fallthru
          _
      $region12: #{tpu_custom_call.1} parent=5 // pred_fallthru
        _
      %p338 = scmp.lt.s32.totalorder %s18, 3
      // Predicated region
      $region17: #{tpu_custom_call.1} parent=5 // pred_check
        %p339 = pneg %p338
      $region18: #{tpu_custom_call.1} parent=5 // pred_check_branch
        %341 = sbr.rel (%p339) target = $region20
      $region19: #{tpu_custom_call.1} parent=5 // pred_region
        // Predicated region
        $region21: #{tpu_custom_call.1} parent=19 // pred_check
          %p342 = pneg %p59
        $region22: #{tpu_custom_call.1} parent=19 // pred_check_branch
          %344 = sbr.rel (%p342) target = $region24
        $region23: #{tpu_custom_call.1} parent=19 // pred_region
          %p345 = scmp.lt.s32.totalorder %s18, 2
          %s346 = scalar_select %p345, %s18, 2
          %s347 = smul.addr %s346, 4
          %s348 = smul.addr %s347, 8
          %s349 = scalar_lea.vmem %s1, %s348
        $region24: #{tpu_custom_call.1} parent=19 // pred_fallthru
          _
        // Predicated region
        $region25: #{tpu_custom_call.1} parent=19 // pred_check
          %p350 = pneg %p85
        $region26: #{tpu_custom_call.1} parent=19 // pred_check_branch
          %352 = sbr.rel (%p350) target = $region28
        $region27: #{tpu_custom_call.1} parent=19 // pred_region
          %p353 = scmp.lt.s32.totalorder %s18, 2
          %s354 = scalar_select %p353, %s18, 2
          %s355 = scalar_lea.vmem %s2, %s354
        $region28: #{tpu_custom_call.1} parent=19 // pred_fallthru
          _
        // Predicated region
        $region29: #{tpu_custom_call.1} parent=19 // pred_check
          %p356 = pneg %p111
        $region30: #{tpu_custom_call.1} parent=19 // pred_check_branch
          %358 = sbr.rel (%p356) target = $region32
        $region31: #{tpu_custom_call.1} parent=19 // pred_region
          %p359 = scmp.lt.s32.totalorder %s18, 2
          %s360 = scalar_select %p359, %s18, 2
          %s361 = scalar_lea.vmem %s3, %s360
        $region32: #{tpu_custom_call.1} parent=19 // pred_fallthru
          _
        // Predicated region
        $region33: #{tpu_custom_call.1} parent=19 // pred_check
          %p362 = pneg %p137
        $region34: #{tpu_custom_call.1} parent=19 // pred_check_branch
          %364 = sbr.rel (%p362) target = $region36
        $region35: #{tpu_custom_call.1} parent=19 // pred_region
          %p365 = scmp.lt.s32.totalorder %s18, 2
          %s366 = scalar_select %p365, %s18, 2
          %s367 = scalar_lea.vmem %s4, %s366
        $region36: #{tpu_custom_call.1} parent=19 // pred_fallthru
          _
        // Predicated region
        $region37: #{tpu_custom_call.1} parent=19 // pred_check
          %p368 = pneg %p163
        $region38: #{tpu_custom_call.1} parent=19 // pred_check_branch
          %370 = sbr.rel (%p368) target = $region40
        $region39: #{tpu_custom_call.1} parent=19 // pred_region
          %p371 = scmp.lt.s32.totalorder %s18, 2
          %s372 = scalar_select %p371, %s18, 2
          %s373 = smul.addr %s372, 4
          %s374 = smul.addr %s373, 8
          %s375 = scalar_lea.vmem %s5, %s374
        $region40: #{tpu_custom_call.1} parent=19 // pred_fallthru
          _
        // Predicated region
        $region41: #{tpu_custom_call.1} parent=19 // pred_check
          %p376 = pneg %p189
        $region42: #{tpu_custom_call.1} parent=19 // pred_check_branch
          %378 = sbr.rel (%p376) target = $region44
        $region43: #{tpu_custom_call.1} parent=19 // pred_region
          %p379 = scmp.lt.s32.totalorder %s18, 2
          %s380 = scalar_select %p379, %s18, 2
          %s381 = scalar_lea.vmem %s6, %s380
        $region44: #{tpu_custom_call.1} parent=19 // pred_fallthru
          _
        // Predicated region
        $region45: #{tpu_custom_call.1} parent=19 // pred_check
          %p382 = pneg %p215
        $region46: #{tpu_custom_call.1} parent=19 // pred_check_branch
          %384 = sbr.rel (%p382) target = $region48
        $region47: #{tpu_custom_call.1} parent=19 // pred_region
          %p385 = scmp.lt.s32.totalorder %s18, 2
          %s386 = scalar_select %p385, %s18, 2
          %s387 = smul.addr %s386, 8
          %s388 = smul.addr %s387, 8
          %s389 = scalar_lea.vmem %s7, %s388
        $region48: #{tpu_custom_call.1} parent=19 // pred_fallthru
          _
        // Predicated region
        $region49: #{tpu_custom_call.1} parent=19 // pred_check
          %p390 = pneg %p241
        $region50: #{tpu_custom_call.1} parent=19 // pred_check_branch
          %392 = sbr.rel (%p390) target = $region52
        $region51: #{tpu_custom_call.1} parent=19 // pred_region
          %p393 = scmp.lt.s32.totalorder %s18, 2
          %s394 = scalar_select %p393, %s18, 2
          %s395 = scalar_lea.vmem %s8, %s394
        $region52: #{tpu_custom_call.1} parent=19 // pred_fallthru
          _
        // Predicated region
        $region53: #{tpu_custom_call.1} parent=19 // pred_check
          %p396 = pneg %p267
        $region54: #{tpu_custom_call.1} parent=19 // pred_check_branch
          %398 = sbr.rel (%p396) target = $region56
        $region55: #{tpu_custom_call.1} parent=19 // pred_region
          %p399 = scmp.lt.s32.totalorder %s18, 2
          %s400 = scalar_select %p399, %s18, 2
          %s401 = scalar_lea.vmem %s9, %s400
        $region56: #{tpu_custom_call.1} parent=19 // pred_fallthru
          _
        // Predicated region
        $region57: #{tpu_custom_call.1} parent=19 // pred_check
          %p402 = pneg %p293
        $region58: #{tpu_custom_call.1} parent=19 // pred_check_branch
          %404 = sbr.rel (%p402) target = $region60
        $region59: #{tpu_custom_call.1} parent=19 // pred_region
          %p405 = scmp.lt.s32.totalorder %s18, 2
          %s406 = scalar_select %p405, %s18, 2
          %s407 = scalar_lea.vmem %s10, %s406
        $region60: #{tpu_custom_call.1} parent=19 // pred_fallthru
          _
      $region20: #{tpu_custom_call.1} parent=5 // pred_fallthru
        _
      %p408 = scmp.le.s32.totalorder 1, %s18
      %p409 = scmp.lt.s32.totalorder %s18, 4
      %p410 = pnand %p408, %p409
      %p411 = pneg %p410
      // Predicated region
      $region61: #{tpu_custom_call.1} parent=5 // pred_check
        _
      $region62: #{tpu_custom_call.1} parent=5 // pred_check_branch
        %413 = sbr.rel (%p410) target = $region64
      $region63: #{tpu_custom_call.1} parent=5 // pred_region
        %s414 = ssub.s32 %s18, 1
        %p415 = pneg %p39
        %p416 = pneg %p36
        %p417 = scmp.lt.s32.totalorder %s23, 2
        %s418 = scalar_select %p417, %s23, 2
        %s419 = smul.addr %s418, 4
        %s420 = smul.addr %s419, 8
        %s421 = scalar_lea.vmem %s1, %s420
        %p422 = pneg %p65
        %p423 = pneg %p62
        %p424 = scmp.lt.s32.totalorder %s23, 2
        %s425 = scalar_select %p424, %s23, 2
        %s426 = scalar_lea.vmem %s2, %s425
        %p427 = pneg %p91
        %p428 = pneg %p88
        %p429 = scmp.lt.s32.totalorder %s23, 2
        %s430 = scalar_select %p429, %s23, 2
        %s431 = scalar_lea.vmem %s3, %s430
        %p432 = pneg %p117
        %p433 = pneg %p114
        %p434 = scmp.lt.s32.totalorder %s23, 2
        %s435 = scalar_select %p434, %s23, 2
        %s436 = scalar_lea.vmem %s4, %s435
        %p437 = pneg %p143
        %p438 = pneg %p140
        %p439 = scmp.lt.s32.totalorder %s23, 2
        %s440 = scalar_select %p439, %s23, 2
        %s441 = smul.addr %s440, 4
        %s442 = smul.addr %s441, 8
        %s443 = scalar_lea.vmem %s5, %s442
        %p444 = pneg %p169
        %p445 = pneg %p166
        %p446 = scmp.lt.s32.totalorder %s23, 2
        %s447 = scalar_select %p446, %s23, 2
        %s448 = scalar_lea.vmem %s6, %s447
        %p449 = pneg %p195
        %p450 = pneg %p192
        %p451 = scmp.lt.s32.totalorder %s23, 2
        %s452 = scalar_select %p451, %s23, 2
        %s453 = smul.addr %s452, 8
        %s454 = smul.addr %s453, 8
        %s455 = scalar_lea.vmem %s7, %s454
        %p456 = pneg %p221
        %p457 = pneg %p218
        %p458 = scmp.lt.s32.totalorder %s23, 2
        %s459 = scalar_select %p458, %s23, 2
        %s460 = scalar_lea.vmem %s8, %s459
        %p461 = pneg %p247
        %p462 = pneg %p244
        %p463 = scmp.lt.s32.totalorder %s23, 2
        %s464 = scalar_select %p463, %s23, 2
        %s465 = scalar_lea.vmem %s9, %s464
        %p466 = pneg %p273
        %p467 = pneg %p270
        %p468 = scmp.lt.s32.totalorder %s23, 2
        %s469 = scalar_select %p468, %s23, 2
        %s470 = scalar_lea.vmem %s10, %s469
        %p471 = pneg %p299
        %p472 = pneg %p296
        %p473 = pneg %p320
        %p474 = pneg %p317
        %p475 = scmp.lt.s32.totalorder %s23, 2
        %s476 = scalar_select %p475, %s23, 2
        %s477 = smul.addr %s476, 4
        %s478 = smul.addr %s477, 8
        %s479 = scalar_lea.vmem %s1, %s478
        %p480 = scmp.lt.s32.totalorder %s23, 2
        %s481 = scalar_select %p480, %s23, 2
        %s482 = scalar_lea.vmem %s2, %s481
        %p483 = scmp.lt.s32.totalorder %s23, 2
        %s484 = scalar_select %p483, %s23, 2
        %s485 = scalar_lea.vmem %s3, %s484
        %p486 = scmp.lt.s32.totalorder %s23, 2
        %s487 = scalar_select %p486, %s23, 2
        %s488 = scalar_lea.vmem %s4, %s487
        %p489 = scmp.lt.s32.totalorder %s23, 2
        %s490 = scalar_select %p489, %s23, 2
        %s491 = smul.addr %s490, 4
        %s492 = smul.addr %s491, 8
        %s493 = scalar_lea.vmem %s5, %s492
        %p494 = scmp.lt.s32.totalorder %s23, 2
        %s495 = scalar_select %p494, %s23, 2
        %s496 = scalar_lea.vmem %s6, %s495
        %p497 = scmp.lt.s32.totalorder %s23, 2
        %s498 = scalar_select %p497, %s23, 2
        %s499 = smul.addr %s498, 8
        %s500 = smul.addr %s499, 8
        %s501 = scalar_lea.vmem %s7, %s500
        %p502 = scmp.lt.s32.totalorder %s23, 2
        %s503 = scalar_select %p502, %s23, 2
        %s504 = scalar_lea.vmem %s8, %s503
        %p505 = scmp.lt.s32.totalorder %s23, 2
        %s506 = scalar_select %p505, %s23, 2
        %s507 = scalar_lea.vmem %s9, %s506
        %p508 = scmp.lt.s32.totalorder %s23, 2
        %s509 = scalar_select %p508, %s23, 2
        %s510 = scalar_lea.vmem %s10, %s509
        %p511 = scmp.eq.s32.totalorder %s23, 0
        // Predicated region
        $region65: #{tpu_custom_call.1} parent=63 // pred_check
          %p512 = pneg %p511
        $region66: #{tpu_custom_call.1} parent=63 // pred_check_branch
          %514 = sbr.rel (%p512) target = $region68
        $region67: #{tpu_custom_call.1} parent=63 // pred_region
          %v515 = vld [vmem:[%s0] sm:$0xff]
          %v516 = vld [vmem:[%s0 + $0x8] sm:$0xff]
          %vm517 = vcmask 261120
          %518 = vst.msk [vmem:[#allocation2] sm:$0xff] %vm517, %v515
          %519 = vst.msk [vmem:[#allocation2 + $0x8] sm:$0xff] %vm517, %v516
        $region68: #{tpu_custom_call.1} parent=63 // pred_fallthru
          _
        %v520 = vld [vmem:[#allocation2] sm:$0xff]
        %v521 = vld [vmem:[#allocation2 + $0x8] sm:$0xff]
        %v522 = vld [vmem:[%s479] sm:$0xff]
        %v523 = vld [vmem:[%s479 + $0x8] sm:$0xff]
        %v524 = vld [vmem:[%s479 + $0x10] sm:$0xff]
        %v525 = vld [vmem:[%s479 + $0x18] sm:$0xff]
        %v526 = vld [vmem:[%s482] sm:$0x1]
        %v528 = vlaneseq
        %v529 = vshrl.u32 %v528, 7
        %v530 = vsub.s32 0, %v529
        %v531 = vrot.slane %v526, %v530
        %vm533 = vcmask 261120
        %v535 = vsel %vm533, %v520, 0
        %v538 = vsel %vm533, %v521, 0
        %540 = vmatprep.subr.mxu0 0.0
        %541 = vmatpush1.msra.mxu0 0.0
        %542 = vmatprep.subr.mxu0 0.0
        %543 = vmatpush1.msra.mxu0 0.0
        %544 = vmatprep.subr.mxu0 0.0
        %545 = vmatpush1.msra.mxu0 0.0
        %546 = vmatprep.subr.mxu0 0.0
        %547 = vmatpush1.msra.mxu0 0.0
        %548 = vmatprep.subr.mxu0 0.0
        %549 = vmatpush1.msra.mxu0 0.0
        %550 = vmatprep.subr.mxu0 0.0
        %551 = vmatpush1.msra.mxu0 0.0
        %552 = vmatprep.subr.mxu0 0.0
        %553 = vmatpush1.msra.mxu0 0.0
        %554 = vmatprep.subr.mxu0 0.0
        %555 = vmatpush1.msra.mxu0 0.0
        %556 = vmatprep.subr.mxu0 0.0
        %557 = vmatpush1.msra.mxu0 0.0
        %558 = vmatprep.subr.mxu0 0.0
        %559 = vmatpush1.msra.mxu0 0.0
        %560 = vmatprep.subr.mxu0 0.0
        %561 = vmatpush1.msra.mxu0 0.0
        %562 = vmatprep.subr.mxu0 0.0
        %563 = vmatpush1.msra.mxu0 0.0
        %564 = vmatprep.subr.mxu0 0.0
        %565 = vmatpush1.msra.mxu0 %v525
        %566 = vmatprep.subr.mxu0 0.0
        %567 = vmatpush1.msra.mxu0 %v524
        %568 = vmatprep.subr.mxu0 0.0
        %569 = vmatpush1.msra.mxu0 %v523
        %570 = vmatprep.subr.mxu0 0.0
        %571 = vmatpush1.msra.mxu0 %v522
        %572 = vmatprep.subr.mxu0 0.0
        %573 = vmatpush2.msra.mxu0 0.0
        %574 = vmatprep.subr.mxu0 0.0
        %575 = vmatpush2.msra.mxu0 0.0
        %576 = vmatprep.subr.mxu0 0.0
        %577 = vmatpush2.msra.mxu0 0.0
        %578 = vmatprep.subr.mxu0 0.0
        %579 = vmatpush2.msra.mxu0 0.0
        %580 = vmatprep.subr.mxu0 0.0
        %581 = vmatpush2.msra.mxu0 0.0
        %582 = vmatprep.subr.mxu0 0.0
        %583 = vmatpush2.msra.mxu0 0.0
        %584 = vmatprep.subr.mxu0 0.0
        %585 = vmatpush2.msra.mxu0 0.0
        %586 = vmatprep.subr.mxu0 0.0
        %587 = vmatpush2.msra.mxu0 0.0
        %588 = vmatprep.subr.mxu0 0.0
        %589 = vmatpush2.msra.mxu0 0.0
        %590 = vmatprep.subr.mxu0 0.0
        %591 = vmatpush2.msra.mxu0 0.0
        %592 = vmatprep.subr.mxu0 0.0
        %593 = vmatpush2.msra.mxu0 0.0
        %594 = vmatprep.subr.mxu0 0.0
        %595 = vmatpush2.msra.mxu0 0.0
        %596 = vmatprep.subr.mxu0 0.0
        %597 = vmatpush2.msra.mxu0 0.0
        %598 = vmatprep.subr.mxu0 0.0
        %599 = vmatpush2.msra.mxu0 0.0
        %600 = vmatprep.subr.mxu0 0.0
        %601 = vmatpush2.msra.mxu0 0.0
        %602 = vmatprep.subr.mxu0 0.0
        %603 = vmatpush2.msra.mxu0 0.0
        %604 = vmatprep.mubr.f32.mxu0 0.0
        %605 = vmatmul.mubr.f32.gmra.mxu0 %v535
        %v606 = vpop.f32.mrf.mxu0
        %v607 = vadd.f32 %v531, %v606
        %v608 = vpop.f32.mrf.mxu0
        %609 = vmatprep.mubr.f32.mxu0 0.0
        %610 = vmatmul.mubr.f32.gmra.mxu0 %v538
        %v611 = vpop.f32.mrf.mxu0
        %v612 = vadd.f32 %v531, %v611
        %v613 = vpop.f32.mrf.mxu0
        %614 = vdwg.mxu0
        %v615 = vmax.f32 %v607, 0.0
        %v616 = vmax.f32 %v612, 0.0
        %619 = vrot.lane.b32.xlu0 %v615, 120
        %v620 = vpop.permute.xlu0 %619
        %621 = vrot.lane.b32.xlu0 %v616, 120
        %v622 = vpop.permute.xlu0 %621
        %623 = vrot.lane.b32.xlu0 %v615, 112
        %v624 = vpop.permute.xlu0 %623
        %625 = vrot.lane.b32.xlu0 %v616, 112
        %v626 = vpop.permute.xlu0 %625
        %627 = vrot.lane.b32.xlu0 %v615, 104
        %v628 = vpop.permute.xlu0 %627
        %629 = vrot.lane.b32.xlu0 %v616, 104
        %v630 = vpop.permute.xlu0 %629
        %631 = vrot.lane.b32.xlu0 %v615, 96
        %v632 = vpop.permute.xlu0 %631
        %vm633 = vcmask 64512
        %v634 = vsel %vm633, %v615, 0
        %v636 = vsel %vm633, %v632, 0
        %638 = vmatprep.subr.mxu0 0.0
        %639 = vmatpush1.xpose.msra.mxu0 0.0
        %640 = vmatprep.subr.mxu0 0.0
        %641 = vmatpush1.xpose.msra.mxu0 0.0
        %642 = vmatprep.subr.mxu0 0.0
        %643 = vmatpush1.xpose.msra.mxu0 0.0
        %644 = vmatprep.subr.mxu0 0.0
        %645 = vmatpush1.xpose.msra.mxu0 0.0
        %646 = vmatprep.subr.mxu0 0.0
        %647 = vmatpush1.xpose.msra.mxu0 0.0
        %648 = vmatprep.subr.mxu0 0.0
        %649 = vmatpush1.xpose.msra.mxu0 0.0
        %650 = vmatprep.subr.mxu0 0.0
        %651 = vmatpush1.xpose.msra.mxu0 0.0
        %652 = vmatprep.subr.mxu0 0.0
        %653 = vmatpush1.xpose.msra.mxu0 0.0
        %654 = vmatprep.subr.mxu0 0.0
        %655 = vmatpush1.xpose.msra.mxu0 0.0
        %656 = vmatprep.subr.mxu0 0.0
        %657 = vmatpush1.xpose.msra.mxu0 0.0
        %658 = vmatprep.subr.mxu0 0.0
        %659 = vmatpush1.xpose.msra.mxu0 0.0
        %660 = vmatprep.subr.mxu0 0.0
        %661 = vmatpush1.xpose.msra.mxu0 0.0
        %662 = vmatprep.subr.mxu0 0.0
        %663 = vmatpush1.xpose.msra.mxu0 0.0
        %664 = vmatprep.subr.mxu0 0.0
        %665 = vmatpush1.xpose.msra.mxu0 0.0
        %666 = vmatprep.subr.mxu0 0.0
        %667 = vmatpush1.xpose.msra.mxu0 0.0
        %668 = vmatprep.subr.mxu0 0.0
        %669 = vmatpush1.xpose.msra.mxu0 %v636
        %670 = vmatprep.subr.mxu0 0.0
        %671 = vmatpush2.xpose.msra.mxu0 0.0
        %672 = vmatprep.subr.mxu0 0.0
        %673 = vmatpush2.xpose.msra.mxu0 0.0
        %674 = vmatprep.subr.mxu0 0.0
        %675 = vmatpush2.xpose.msra.mxu0 0.0
        %676 = vmatprep.subr.mxu0 0.0
        %677 = vmatpush2.xpose.msra.mxu0 0.0
        %678 = vmatprep.subr.mxu0 0.0
        %679 = vmatpush2.xpose.msra.mxu0 0.0
        %680 = vmatprep.subr.mxu0 0.0
        %681 = vmatpush2.xpose.msra.mxu0 0.0
        %682 = vmatprep.subr.mxu0 0.0
        %683 = vmatpush2.xpose.msra.mxu0 0.0
        %684 = vmatprep.subr.mxu0 0.0
        %685 = vmatpush2.xpose.msra.mxu0 0.0
        %686 = vmatprep.subr.mxu0 0.0
        %687 = vmatpush2.xpose.msra.mxu0 0.0
        %688 = vmatprep.subr.mxu0 0.0
        %689 = vmatpush2.xpose.msra.mxu0 0.0
        %690 = vmatprep.subr.mxu0 0.0
        %691 = vmatpush2.xpose.msra.mxu0 0.0
        %692 = vmatprep.subr.mxu0 0.0
        %693 = vmatpush2.xpose.msra.mxu0 0.0
        %694 = vmatprep.subr.mxu0 0.0
        %695 = vmatpush2.xpose.msra.mxu0 0.0
        %696 = vmatprep.subr.mxu0 0.0
        %697 = vmatpush2.xpose.msra.mxu0 0.0
        %698 = vmatprep.subr.mxu0 0.0
        %699 = vmatpush2.xpose.msra.mxu0 0.0
        %700 = vmatprep.subr.mxu0 0.0
        %701 = vmatpush2.xpose.msra.mxu0 0.0
        %702 = vmatprep.mubr.f32.mxu0 0.0
        %703 = vmatmul.mubr.f32.gmra.mxu0 %v634
        %v704 = vpop.f32.mrf.mxu0
        %v705 = vadd.f32 0.0, %v704
        %v706 = vpop.f32.mrf.mxu0
        %707 = vdwg.mxu0
        %708 = vrot.lane.b32.xlu0 %v616, 96
        %v709 = vpop.permute.xlu0 %708
        %v710 = vsel %vm633, %v616, 0
        %v712 = vsel %vm633, %v709, 0
        %714 = vmatprep.subr.mxu0 0.0
        %715 = vmatpush1.xpose.msra.mxu0 0.0
        %716 = vmatprep.subr.mxu0 0.0
        %717 = vmatpush1.xpose.msra.mxu0 0.0
        %718 = vmatprep.subr.mxu0 0.0
        %719 = vmatpush1.xpose.msra.mxu0 0.0
        %720 = vmatprep.subr.mxu0 0.0
        %721 = vmatpush1.xpose.msra.mxu0 0.0
        %722 = vmatprep.subr.mxu0 0.0
        %723 = vmatpush1.xpose.msra.mxu0 0.0
        %724 = vmatprep.subr.mxu0 0.0
        %725 = vmatpush1.xpose.msra.mxu0 0.0
        %726 = vmatprep.subr.mxu0 0.0
        %727 = vmatpush1.xpose.msra.mxu0 0.0
        %728 = vmatprep.subr.mxu0 0.0
        %729 = vmatpush1.xpose.msra.mxu0 0.0
        %730 = vmatprep.subr.mxu0 0.0
        %731 = vmatpush1.xpose.msra.mxu0 0.0
        %732 = vmatprep.subr.mxu0 0.0
        %733 = vmatpush1.xpose.msra.mxu0 0.0
        %734 = vmatprep.subr.mxu0 0.0
        %735 = vmatpush1.xpose.msra.mxu0 0.0
        %736 = vmatprep.subr.mxu0 0.0
        %737 = vmatpush1.xpose.msra.mxu0 0.0
        %738 = vmatprep.subr.mxu0 0.0
        %739 = vmatpush1.xpose.msra.mxu0 0.0
        %740 = vmatprep.subr.mxu0 0.0
        %741 = vmatpush1.xpose.msra.mxu0 0.0
        %742 = vmatprep.subr.mxu0 0.0
        %743 = vmatpush1.xpose.msra.mxu0 0.0
        %744 = vmatprep.subr.mxu0 0.0
        %745 = vmatpush1.xpose.msra.mxu0 %v712
        %746 = vmatprep.subr.mxu0 0.0
        %747 = vmatpush2.xpose.msra.mxu0 0.0
        %748 = vmatprep.subr.mxu0 0.0
        %749 = vmatpush2.xpose.msra.mxu0 0.0
        %750 = vmatprep.subr.mxu0 0.0
        %751 = vmatpush2.xpose.msra.mxu0 0.0
        %752 = vmatprep.subr.mxu0 0.0
        %753 = vmatpush2.xpose.msra.mxu0 0.0
        %754 = vmatprep.subr.mxu0 0.0
        %755 = vmatpush2.xpose.msra.mxu0 0.0
        %756 = vmatprep.subr.mxu0 0.0
        %757 = vmatpush2.xpose.msra.mxu0 0.0
        %758 = vmatprep.subr.mxu0 0.0
        %759 = vmatpush2.xpose.msra.mxu0 0.0
        %760 = vmatprep.subr.mxu0 0.0
        %761 = vmatpush2.xpose.msra.mxu0 0.0
        %762 = vmatprep.subr.mxu0 0.0
        %763 = vmatpush2.xpose.msra.mxu0 0.0
        %764 = vmatprep.subr.mxu0 0.0
        %765 = vmatpush2.xpose.msra.mxu0 0.0
        %766 = vmatprep.subr.mxu0 0.0
        %767 = vmatpush2.xpose.msra.mxu0 0.0
        %768 = vmatprep.subr.mxu0 0.0
        %769 = vmatpush2.xpose.msra.mxu0 0.0
        %770 = vmatprep.subr.mxu0 0.0
        %771 = vmatpush2.xpose.msra.mxu0 0.0
        %772 = vmatprep.subr.mxu0 0.0
        %773 = vmatpush2.xpose.msra.mxu0 0.0
        %774 = vmatprep.subr.mxu0 0.0
        %775 = vmatpush2.xpose.msra.mxu0 0.0
        %776 = vmatprep.subr.mxu0 0.0
        %777 = vmatpush2.xpose.msra.mxu0 0.0
        %778 = vmatprep.mubr.f32.mxu0 0.0
        %779 = vmatmul.mubr.f32.gmra.mxu0 %v710
        %v780 = vpop.f32.mrf.mxu0
        %v781 = vadd.f32 0.0, %v780
        %v782 = vpop.f32.mrf.mxu0
        %783 = vdwg.mxu0
        %784 = vrot.lane.b32.xlu0 %v620, 96
        %v785 = vpop.permute.xlu0 %784
        %v786 = vsel %vm633, %v620, 0
        %v788 = vsel %vm633, %v785, 0
        %790 = vmatprep.subr.mxu0 0.0
        %791 = vmatpush1.xpose.msra.mxu0 0.0
        %792 = vmatprep.subr.mxu0 0.0
        %793 = vmatpush1.xpose.msra.mxu0 0.0
        %794 = vmatprep.subr.mxu0 0.0
        %795 = vmatpush1.xpose.msra.mxu0 0.0
        %796 = vmatprep.subr.mxu0 0.0
        %797 = vmatpush1.xpose.msra.mxu0 0.0
        %798 = vmatprep.subr.mxu0 0.0
        %799 = vmatpush1.xpose.msra.mxu0 0.0
        %800 = vmatprep.subr.mxu0 0.0
        %801 = vmatpush1.xpose.msra.mxu0 0.0
        %802 = vmatprep.subr.mxu0 0.0
        %803 = vmatpush1.xpose.msra.mxu0 0.0
        %804 = vmatprep.subr.mxu0 0.0
        %805 = vmatpush1.xpose.msra.mxu0 0.0
        %806 = vmatprep.subr.mxu0 0.0
        %807 = vmatpush1.xpose.msra.mxu0 0.0
        %808 = vmatprep.subr.mxu0 0.0
        %809 = vmatpush1.xpose.msra.mxu0 0.0
        %810 = vmatprep.subr.mxu0 0.0
        %811 = vmatpush1.xpose.msra.mxu0 0.0
        %812 = vmatprep.subr.mxu0 0.0
        %813 = vmatpush1.xpose.msra.mxu0 0.0
        %814 = vmatprep.subr.mxu0 0.0
        %815 = vmatpush1.xpose.msra.mxu0 0.0
        %816 = vmatprep.subr.mxu0 0.0
        %817 = vmatpush1.xpose.msra.mxu0 0.0
        %818 = vmatprep.subr.mxu0 0.0
        %819 = vmatpush1.xpose.msra.mxu0 0.0
        %820 = vmatprep.subr.mxu0 0.0
        %821 = vmatpush1.xpose.msra.mxu0 %v788
        %822 = vmatprep.subr.mxu0 0.0
        %823 = vmatpush2.xpose.msra.mxu0 0.0
        %824 = vmatprep.subr.mxu0 0.0
        %825 = vmatpush2.xpose.msra.mxu0 0.0
        %826 = vmatprep.subr.mxu0 0.0
        %827 = vmatpush2.xpose.msra.mxu0 0.0
        %828 = vmatprep.subr.mxu0 0.0
        %829 = vmatpush2.xpose.msra.mxu0 0.0
        %830 = vmatprep.subr.mxu0 0.0
        %831 = vmatpush2.xpose.msra.mxu0 0.0
        %832 = vmatprep.subr.mxu0 0.0
        %833 = vmatpush2.xpose.msra.mxu0 0.0
        %834 = vmatprep.subr.mxu0 0.0
        %835 = vmatpush2.xpose.msra.mxu0 0.0
        %836 = vmatprep.subr.mxu0 0.0
        %837 = vmatpush2.xpose.msra.mxu0 0.0
        %838 = vmatprep.subr.mxu0 0.0
        %839 = vmatpush2.xpose.msra.mxu0 0.0
        %840 = vmatprep.subr.mxu0 0.0
        %841 = vmatpush2.xpose.msra.mxu0 0.0
        %842 = vmatprep.subr.mxu0 0.0
        %843 = vmatpush2.xpose.msra.mxu0 0.0
        %844 = vmatprep.subr.mxu0 0.0
        %845 = vmatpush2.xpose.msra.mxu0 0.0
        %846 = vmatprep.subr.mxu0 0.0
        %847 = vmatpush2.xpose.msra.mxu0 0.0
        %848 = vmatprep.subr.mxu0 0.0
        %849 = vmatpush2.xpose.msra.mxu0 0.0
        %850 = vmatprep.subr.mxu0 0.0
        %851 = vmatpush2.xpose.msra.mxu0 0.0
        %852 = vmatprep.subr.mxu0 0.0
        %853 = vmatpush2.xpose.msra.mxu0 0.0
        %854 = vmatprep.mubr.f32.mxu0 0.0
        %855 = vmatmul.mubr.f32.gmra.mxu0 %v786
        %v856 = vpop.f32.mrf.mxu0
        %v857 = vadd.f32 0.0, %v856
        %v858 = vpop.f32.mrf.mxu0
        %859 = vdwg.mxu0
        %860 = vrot.lane.b32.xlu0 %v622, 96
        %v861 = vpop.permute.xlu0 %860
        %v862 = vsel %vm633, %v622, 0
        %v864 = vsel %vm633, %v861, 0
        %866 = vmatprep.subr.mxu0 0.0
        %867 = vmatpush1.xpose.msra.mxu0 0.0
        %868 = vmatprep.subr.mxu0 0.0
        %869 = vmatpush1.xpose.msra.mxu0 0.0
        %870 = vmatprep.subr.mxu0 0.0
        %871 = vmatpush1.xpose.msra.mxu0 0.0
        %872 = vmatprep.subr.mxu0 0.0
        %873 = vmatpush1.xpose.msra.mxu0 0.0
        %874 = vmatprep.subr.mxu0 0.0
        %875 = vmatpush1.xpose.msra.mxu0 0.0
        %876 = vmatprep.subr.mxu0 0.0
        %877 = vmatpush1.xpose.msra.mxu0 0.0
        %878 = vmatprep.subr.mxu0 0.0
        %879 = vmatpush1.xpose.msra.mxu0 0.0
        %880 = vmatprep.subr.mxu0 0.0
        %881 = vmatpush1.xpose.msra.mxu0 0.0
        %882 = vmatprep.subr.mxu0 0.0
        %883 = vmatpush1.xpose.msra.mxu0 0.0
        %884 = vmatprep.subr.mxu0 0.0
        %885 = vmatpush1.xpose.msra.mxu0 0.0
        %886 = vmatprep.subr.mxu0 0.0
        %887 = vmatpush1.xpose.msra.mxu0 0.0
        %888 = vmatprep.subr.mxu0 0.0
        %889 = vmatpush1.xpose.msra.mxu0 0.0
        %890 = vmatprep.subr.mxu0 0.0
        %891 = vmatpush1.xpose.msra.mxu0 0.0
        %892 = vmatprep.subr.mxu0 0.0
        %893 = vmatpush1.xpose.msra.mxu0 0.0
        %894 = vmatprep.subr.mxu0 0.0
        %895 = vmatpush1.xpose.msra.mxu0 0.0
        %896 = vmatprep.subr.mxu0 0.0
        %897 = vmatpush1.xpose.msra.mxu0 %v864
        %898 = vmatprep.subr.mxu0 0.0
        %899 = vmatpush2.xpose.msra.mxu0 0.0
        %900 = vmatprep.subr.mxu0 0.0
        %901 = vmatpush2.xpose.msra.mxu0 0.0
        %902 = vmatprep.subr.mxu0 0.0
        %903 = vmatpush2.xpose.msra.mxu0 0.0
        %904 = vmatprep.subr.mxu0 0.0
        %905 = vmatpush2.xpose.msra.mxu0 0.0
        %906 = vmatprep.subr.mxu0 0.0
        %907 = vmatpush2.xpose.msra.mxu0 0.0
        %908 = vmatprep.subr.mxu0 0.0
        %909 = vmatpush2.xpose.msra.mxu0 0.0
        %910 = vmatprep.subr.mxu0 0.0
        %911 = vmatpush2.xpose.msra.mxu0 0.0
        %912 = vmatprep.subr.mxu0 0.0
        %913 = vmatpush2.xpose.msra.mxu0 0.0
        %914 = vmatprep.subr.mxu0 0.0
        %915 = vmatpush2.xpose.msra.mxu0 0.0
        %916 = vmatprep.subr.mxu0 0.0
        %917 = vmatpush2.xpose.msra.mxu0 0.0
        %918 = vmatprep.subr.mxu0 0.0
        %919 = vmatpush2.xpose.msra.mxu0 0.0
        %920 = vmatprep.subr.mxu0 0.0
        %921 = vmatpush2.xpose.msra.mxu0 0.0
        %922 = vmatprep.subr.mxu0 0.0
        %923 = vmatpush2.xpose.msra.mxu0 0.0
        %924 = vmatprep.subr.mxu0 0.0
        %925 = vmatpush2.xpose.msra.mxu0 0.0
        %926 = vmatprep.subr.mxu0 0.0
        %927 = vmatpush2.xpose.msra.mxu0 0.0
        %928 = vmatprep.subr.mxu0 0.0
        %929 = vmatpush2.xpose.msra.mxu0 0.0
        %930 = vmatprep.mubr.f32.mxu0 0.0
        %931 = vmatmul.mubr.f32.gmra.mxu0 %v862
        %v932 = vpop.f32.mrf.mxu0
        %v933 = vadd.f32 0.0, %v932
        %v934 = vpop.f32.mrf.mxu0
        %935 = vdwg.mxu0
        %936 = vrot.lane.b32.xlu0 %v624, 96
        %v937 = vpop.permute.xlu0 %936
        %v938 = vsel %vm633, %v624, 0
        %v940 = vsel %vm633, %v937, 0
        %942 = vmatprep.subr.mxu0 0.0
        %943 = vmatpush1.xpose.msra.mxu0 0.0
        %944 = vmatprep.subr.mxu0 0.0
        %945 = vmatpush1.xpose.msra.mxu0 0.0
        %946 = vmatprep.subr.mxu0 0.0
        %947 = vmatpush1.xpose.msra.mxu0 0.0
        %948 = vmatprep.subr.mxu0 0.0
        %949 = vmatpush1.xpose.msra.mxu0 0.0
        %950 = vmatprep.subr.mxu0 0.0
        %951 = vmatpush1.xpose.msra.mxu0 0.0
        %952 = vmatprep.subr.mxu0 0.0
        %953 = vmatpush1.xpose.msra.mxu0 0.0
        %954 = vmatprep.subr.mxu0 0.0
        %955 = vmatpush1.xpose.msra.mxu0 0.0
        %956 = vmatprep.subr.mxu0 0.0
        %957 = vmatpush1.xpose.msra.mxu0 0.0
        %958 = vmatprep.subr.mxu0 0.0
        %959 = vmatpush1.xpose.msra.mxu0 0.0
        %960 = vmatprep.subr.mxu0 0.0
        %961 = vmatpush1.xpose.msra.mxu0 0.0
        %962 = vmatprep.subr.mxu0 0.0
        %963 = vmatpush1.xpose.msra.mxu0 0.0
        %964 = vmatprep.subr.mxu0 0.0
        %965 = vmatpush1.xpose.msra.mxu0 0.0
        %966 = vmatprep.subr.mxu0 0.0
        %967 = vmatpush1.xpose.msra.mxu0 0.0
        %968 = vmatprep.subr.mxu0 0.0
        %969 = vmatpush1.xpose.msra.mxu0 0.0
        %970 = vmatprep.subr.mxu0 0.0
        %971 = vmatpush1.xpose.msra.mxu0 0.0
        %972 = vmatprep.subr.mxu0 0.0
        %973 = vmatpush1.xpose.msra.mxu0 %v940
        %974 = vmatprep.subr.mxu0 0.0
        %975 = vmatpush2.xpose.msra.mxu0 0.0
        %976 = vmatprep.subr.mxu0 0.0
        %977 = vmatpush2.xpose.msra.mxu0 0.0
        %978 = vmatprep.subr.mxu0 0.0
        %979 = vmatpush2.xpose.msra.mxu0 0.0
        %980 = vmatprep.subr.mxu0 0.0
        %981 = vmatpush2.xpose.msra.mxu0 0.0
        %982 = vmatprep.subr.mxu0 0.0
        %983 = vmatpush2.xpose.msra.mxu0 0.0
        %984 = vmatprep.subr.mxu0 0.0
        %985 = vmatpush2.xpose.msra.mxu0 0.0
        %986 = vmatprep.subr.mxu0 0.0
        %987 = vmatpush2.xpose.msra.mxu0 0.0
        %988 = vmatprep.subr.mxu0 0.0
        %989 = vmatpush2.xpose.msra.mxu0 0.0
        %990 = vmatprep.subr.mxu0 0.0
        %991 = vmatpush2.xpose.msra.mxu0 0.0
        %992 = vmatprep.subr.mxu0 0.0
        %993 = vmatpush2.xpose.msra.mxu0 0.0
        %994 = vmatprep.subr.mxu0 0.0
        %995 = vmatpush2.xpose.msra.mxu0 0.0
        %996 = vmatprep.subr.mxu0 0.0
        %997 = vmatpush2.xpose.msra.mxu0 0.0
        %998 = vmatprep.subr.mxu0 0.0
        %999 = vmatpush2.xpose.msra.mxu0 0.0
        %1000 = vmatprep.subr.mxu0 0.0
        %1001 = vmatpush2.xpose.msra.mxu0 0.0
        %1002 = vmatprep.subr.mxu0 0.0
        %1003 = vmatpush2.xpose.msra.mxu0 0.0
        %1004 = vmatprep.subr.mxu0 0.0
        %1005 = vmatpush2.xpose.msra.mxu0 0.0
        %1006 = vmatprep.mubr.f32.mxu0 0.0
        %1007 = vmatmul.mubr.f32.gmra.mxu0 %v938
        %v1008 = vpop.f32.mrf.mxu0
        %v1009 = vadd.f32 0.0, %v1008
        %v1010 = vpop.f32.mrf.mxu0
        %1011 = vdwg.mxu0
        %1012 = vrot.lane.b32.xlu0 %v626, 96
        %v1013 = vpop.permute.xlu0 %1012
        %v1014 = vsel %vm633, %v626, 0
        %v1016 = vsel %vm633, %v1013, 0
        %1018 = vmatprep.subr.mxu0 0.0
        %1019 = vmatpush1.xpose.msra.mxu0 0.0
        %1020 = vmatprep.subr.mxu0 0.0
        %1021 = vmatpush1.xpose.msra.mxu0 0.0
        %1022 = vmatprep.subr.mxu0 0.0
        %1023 = vmatpush1.xpose.msra.mxu0 0.0
        %1024 = vmatprep.subr.mxu0 0.0
        %1025 = vmatpush1.xpose.msra.mxu0 0.0
        %1026 = vmatprep.subr.mxu0 0.0
        %1027 = vmatpush1.xpose.msra.mxu0 0.0
        %1028 = vmatprep.subr.mxu0 0.0
        %1029 = vmatpush1.xpose.msra.mxu0 0.0
        %1030 = vmatprep.subr.mxu0 0.0
        %1031 = vmatpush1.xpose.msra.mxu0 0.0
        %1032 = vmatprep.subr.mxu0 0.0
        %1033 = vmatpush1.xpose.msra.mxu0 0.0
        %1034 = vmatprep.subr.mxu0 0.0
        %1035 = vmatpush1.xpose.msra.mxu0 0.0
        %1036 = vmatprep.subr.mxu0 0.0
        %1037 = vmatpush1.xpose.msra.mxu0 0.0
        %1038 = vmatprep.subr.mxu0 0.0
        %1039 = vmatpush1.xpose.msra.mxu0 0.0
        %1040 = vmatprep.subr.mxu0 0.0
        %1041 = vmatpush1.xpose.msra.mxu0 0.0
        %1042 = vmatprep.subr.mxu0 0.0
        %1043 = vmatpush1.xpose.msra.mxu0 0.0
        %1044 = vmatprep.subr.mxu0 0.0
        %1045 = vmatpush1.xpose.msra.mxu0 0.0
        %1046 = vmatprep.subr.mxu0 0.0
        %1047 = vmatpush1.xpose.msra.mxu0 0.0
        %1048 = vmatprep.subr.mxu0 0.0
        %1049 = vmatpush1.xpose.msra.mxu0 %v1016
        %1050 = vmatprep.subr.mxu0 0.0
        %1051 = vmatpush2.xpose.msra.mxu0 0.0
        %1052 = vmatprep.subr.mxu0 0.0
        %1053 = vmatpush2.xpose.msra.mxu0 0.0
        %1054 = vmatprep.subr.mxu0 0.0
        %1055 = vmatpush2.xpose.msra.mxu0 0.0
        %1056 = vmatprep.subr.mxu0 0.0
        %1057 = vmatpush2.xpose.msra.mxu0 0.0
        %1058 = vmatprep.subr.mxu0 0.0
        %1059 = vmatpush2.xpose.msra.mxu0 0.0
        %1060 = vmatprep.subr.mxu0 0.0
        %1061 = vmatpush2.xpose.msra.mxu0 0.0
        %1062 = vmatprep.subr.mxu0 0.0
        %1063 = vmatpush2.xpose.msra.mxu0 0.0
        %1064 = vmatprep.subr.mxu0 0.0
        %1065 = vmatpush2.xpose.msra.mxu0 0.0
        %1066 = vmatprep.subr.mxu0 0.0
        %1067 = vmatpush2.xpose.msra.mxu0 0.0
        %1068 = vmatprep.subr.mxu0 0.0
        %1069 = vmatpush2.xpose.msra.mxu0 0.0
        %1070 = vmatprep.subr.mxu0 0.0
        %1071 = vmatpush2.xpose.msra.mxu0 0.0
        %1072 = vmatprep.subr.mxu0 0.0
        %1073 = vmatpush2.xpose.msra.mxu0 0.0
        %1074 = vmatprep.subr.mxu0 0.0
        %1075 = vmatpush2.xpose.msra.mxu0 0.0
        %1076 = vmatprep.subr.mxu0 0.0
        %1077 = vmatpush2.xpose.msra.mxu0 0.0
        %1078 = vmatprep.subr.mxu0 0.0
        %1079 = vmatpush2.xpose.msra.mxu0 0.0
        %1080 = vmatprep.subr.mxu0 0.0
        %1081 = vmatpush2.xpose.msra.mxu0 0.0
        %1082 = vmatprep.mubr.f32.mxu0 0.0
        %1083 = vmatmul.mubr.f32.gmra.mxu0 %v1014
        %v1084 = vpop.f32.mrf.mxu0
        %v1085 = vadd.f32 0.0, %v1084
        %v1086 = vpop.f32.mrf.mxu0
        %1087 = vdwg.mxu0
        %1088 = vrot.lane.b32.xlu0 %v628, 96
        %v1089 = vpop.permute.xlu0 %1088
        %v1090 = vsel %vm633, %v628, 0
        %v1092 = vsel %vm633, %v1089, 0
        %1094 = vmatprep.subr.mxu0 0.0
        %1095 = vmatpush1.xpose.msra.mxu0 0.0
        %1096 = vmatprep.subr.mxu0 0.0
        %1097 = vmatpush1.xpose.msra.mxu0 0.0
        %1098 = vmatprep.subr.mxu0 0.0
        %1099 = vmatpush1.xpose.msra.mxu0 0.0
        %1100 = vmatprep.subr.mxu0 0.0
        %1101 = vmatpush1.xpose.msra.mxu0 0.0
        %1102 = vmatprep.subr.mxu0 0.0
        %1103 = vmatpush1.xpose.msra.mxu0 0.0
        %1104 = vmatprep.subr.mxu0 0.0
        %1105 = vmatpush1.xpose.msra.mxu0 0.0
        %1106 = vmatprep.subr.mxu0 0.0
        %1107 = vmatpush1.xpose.msra.mxu0 0.0
        %1108 = vmatprep.subr.mxu0 0.0
        %1109 = vmatpush1.xpose.msra.mxu0 0.0
        %1110 = vmatprep.subr.mxu0 0.0
        %1111 = vmatpush1.xpose.msra.mxu0 0.0
        %1112 = vmatprep.subr.mxu0 0.0
        %1113 = vmatpush1.xpose.msra.mxu0 0.0
        %1114 = vmatprep.subr.mxu0 0.0
        %1115 = vmatpush1.xpose.msra.mxu0 0.0
        %1116 = vmatprep.subr.mxu0 0.0
        %1117 = vmatpush1.xpose.msra.mxu0 0.0
        %1118 = vmatprep.subr.mxu0 0.0
        %1119 = vmatpush1.xpose.msra.mxu0 0.0
        %1120 = vmatprep.subr.mxu0 0.0
        %1121 = vmatpush1.xpose.msra.mxu0 0.0
        %1122 = vmatprep.subr.mxu0 0.0
        %1123 = vmatpush1.xpose.msra.mxu0 0.0
        %1124 = vmatprep.subr.mxu0 0.0
        %1125 = vmatpush1.xpose.msra.mxu0 %v1092
        %1126 = vmatprep.subr.mxu0 0.0
        %1127 = vmatpush2.xpose.msra.mxu0 0.0
        %1128 = vmatprep.subr.mxu0 0.0
        %1129 = vmatpush2.xpose.msra.mxu0 0.0
        %1130 = vmatprep.subr.mxu0 0.0
        %1131 = vmatpush2.xpose.msra.mxu0 0.0
        %1132 = vmatprep.subr.mxu0 0.0
        %1133 = vmatpush2.xpose.msra.mxu0 0.0
        %1134 = vmatprep.subr.mxu0 0.0
        %1135 = vmatpush2.xpose.msra.mxu0 0.0
        %1136 = vmatprep.subr.mxu0 0.0
        %1137 = vmatpush2.xpose.msra.mxu0 0.0
        %1138 = vmatprep.subr.mxu0 0.0
        %1139 = vmatpush2.xpose.msra.mxu0 0.0
        %1140 = vmatprep.subr.mxu0 0.0
        %1141 = vmatpush2.xpose.msra.mxu0 0.0
        %1142 = vmatprep.subr.mxu0 0.0
        %1143 = vmatpush2.xpose.msra.mxu0 0.0
        %1144 = vmatprep.subr.mxu0 0.0
        %1145 = vmatpush2.xpose.msra.mxu0 0.0
        %1146 = vmatprep.subr.mxu0 0.0
        %1147 = vmatpush2.xpose.msra.mxu0 0.0
        %1148 = vmatprep.subr.mxu0 0.0
        %1149 = vmatpush2.xpose.msra.mxu0 0.0
        %1150 = vmatprep.subr.mxu0 0.0
        %1151 = vmatpush2.xpose.msra.mxu0 0.0
        %1152 = vmatprep.subr.mxu0 0.0
        %1153 = vmatpush2.xpose.msra.mxu0 0.0
        %1154 = vmatprep.subr.mxu0 0.0
        %1155 = vmatpush2.xpose.msra.mxu0 0.0
        %1156 = vmatprep.subr.mxu0 0.0
        %1157 = vmatpush2.xpose.msra.mxu0 0.0
        %1158 = vmatprep.mubr.f32.mxu0 0.0
        %1159 = vmatmul.mubr.f32.gmra.mxu0 %v1090
        %v1160 = vpop.f32.mrf.mxu0
        %v1161 = vadd.f32 0.0, %v1160
        %v1162 = vpop.f32.mrf.mxu0
        %1163 = vdwg.mxu0
        %1164 = vrot.lane.b32.xlu0 %v630, 96
        %v1165 = vpop.permute.xlu0 %1164
        %v1166 = vsel %vm633, %v630, 0
        %v1168 = vsel %vm633, %v1165, 0
        %1170 = vmatprep.subr.mxu0 0.0
        %1171 = vmatpush1.xpose.msra.mxu0 0.0
        %1172 = vmatprep.subr.mxu0 0.0
        %1173 = vmatpush1.xpose.msra.mxu0 0.0
        %1174 = vmatprep.subr.mxu0 0.0
        %1175 = vmatpush1.xpose.msra.mxu0 0.0
        %1176 = vmatprep.subr.mxu0 0.0
        %1177 = vmatpush1.xpose.msra.mxu0 0.0
        %1178 = vmatprep.subr.mxu0 0.0
        %1179 = vmatpush1.xpose.msra.mxu0 0.0
        %1180 = vmatprep.subr.mxu0 0.0
        %1181 = vmatpush1.xpose.msra.mxu0 0.0
        %1182 = vmatprep.subr.mxu0 0.0
        %1183 = vmatpush1.xpose.msra.mxu0 0.0
        %1184 = vmatprep.subr.mxu0 0.0
        %1185 = vmatpush1.xpose.msra.mxu0 0.0
        %1186 = vmatprep.subr.mxu0 0.0
        %1187 = vmatpush1.xpose.msra.mxu0 0.0
        %1188 = vmatprep.subr.mxu0 0.0
        %1189 = vmatpush1.xpose.msra.mxu0 0.0
        %1190 = vmatprep.subr.mxu0 0.0
        %1191 = vmatpush1.xpose.msra.mxu0 0.0
        %1192 = vmatprep.subr.mxu0 0.0
        %1193 = vmatpush1.xpose.msra.mxu0 0.0
        %1194 = vmatprep.subr.mxu0 0.0
        %1195 = vmatpush1.xpose.msra.mxu0 0.0
        %1196 = vmatprep.subr.mxu0 0.0
        %1197 = vmatpush1.xpose.msra.mxu0 0.0
        %1198 = vmatprep.subr.mxu0 0.0
        %1199 = vmatpush1.xpose.msra.mxu0 0.0
        %1200 = vmatprep.subr.mxu0 0.0
        %1201 = vmatpush1.xpose.msra.mxu0 %v1168
        %1202 = vmatprep.subr.mxu0 0.0
        %1203 = vmatpush2.xpose.msra.mxu0 0.0
        %1204 = vmatprep.subr.mxu0 0.0
        %1205 = vmatpush2.xpose.msra.mxu0 0.0
        %1206 = vmatprep.subr.mxu0 0.0
        %1207 = vmatpush2.xpose.msra.mxu0 0.0
        %1208 = vmatprep.subr.mxu0 0.0
        %1209 = vmatpush2.xpose.msra.mxu0 0.0
        %1210 = vmatprep.subr.mxu0 0.0
        %1211 = vmatpush2.xpose.msra.mxu0 0.0
        %1212 = vmatprep.subr.mxu0 0.0
        %1213 = vmatpush2.xpose.msra.mxu0 0.0
        %1214 = vmatprep.subr.mxu0 0.0
        %1215 = vmatpush2.xpose.msra.mxu0 0.0
        %1216 = vmatprep.subr.mxu0 0.0
        %1217 = vmatpush2.xpose.msra.mxu0 0.0
        %1218 = vmatprep.subr.mxu0 0.0
        %1219 = vmatpush2.xpose.msra.mxu0 0.0
        %1220 = vmatprep.subr.mxu0 0.0
        %1221 = vmatpush2.xpose.msra.mxu0 0.0
        %1222 = vmatprep.subr.mxu0 0.0
        %1223 = vmatpush2.xpose.msra.mxu0 0.0
        %1224 = vmatprep.subr.mxu0 0.0
        %1225 = vmatpush2.xpose.msra.mxu0 0.0
        %1226 = vmatprep.subr.mxu0 0.0
        %1227 = vmatpush2.xpose.msra.mxu0 0.0
        %1228 = vmatprep.subr.mxu0 0.0
        %1229 = vmatpush2.xpose.msra.mxu0 0.0
        %1230 = vmatprep.subr.mxu0 0.0
        %1231 = vmatpush2.xpose.msra.mxu0 0.0
        %1232 = vmatprep.subr.mxu0 0.0
        %1233 = vmatpush2.xpose.msra.mxu0 0.0
        %1234 = vmatprep.mubr.f32.mxu0 0.0
        %1235 = vmatmul.mubr.f32.gmra.mxu0 %v1166
        %v1236 = vpop.f32.mrf.mxu0
        %v1237 = vadd.f32 0.0, %v1236
        %v1238 = vpop.f32.mrf.mxu0
        %1239 = vdwg.mxu0
        %v1240 = vmul.f32 %v705, 0.35355338
        %v1241 = vmul.f32 %v781, 0.35355338
        %v1242 = vmul.f32 %v857, 0.35355338
        %v1243 = vmul.f32 %v933, 0.35355338
        %v1244 = vmul.f32 %v1009, 0.35355338
        %v1245 = vmul.f32 %v1085, 0.35355338
        %v1246 = vmul.f32 %v1161, 0.35355338
        %v1247 = vmul.f32 %v1237, 0.35355338
        %v1248 = vsel %vm633, %v1240, -inf
        %1249 = vmax.xlane.f32.xlu0 %v1248
        %v1250 = vpop.xlane.xlu0 %1249
        %v1251 = vsel %vm633, %v1241, -inf
        %1252 = vmax.xlane.f32.xlu0 %v1251
        %v1253 = vpop.xlane.xlu0 %1252
        %v1254 = vsel %vm633, %v1242, -inf
        %1255 = vmax.xlane.f32.xlu0 %v1254
        %v1256 = vpop.xlane.xlu0 %1255
        %v1257 = vsel %vm633, %v1243, -inf
        %1258 = vmax.xlane.f32.xlu0 %v1257
        %v1259 = vpop.xlane.xlu0 %1258
        %v1260 = vsel %vm633, %v1244, -inf
        %1261 = vmax.xlane.f32.xlu0 %v1260
        %v1262 = vpop.xlane.xlu0 %1261
        %v1263 = vsel %vm633, %v1245, -inf
        %1264 = vmax.xlane.f32.xlu0 %v1263
        %v1265 = vpop.xlane.xlu0 %1264
        %v1266 = vsel %vm633, %v1246, -inf
        %1267 = vmax.xlane.f32.xlu0 %v1266
        %v1268 = vpop.xlane.xlu0 %1267
        %v1269 = vsel %vm633, %v1247, -inf
        %1270 = vmax.xlane.f32.xlu0 %v1269
        %v1271 = vpop.xlane.xlu0 %1270
        %v1272 = vsub.f32 %v1240, %v1250
        %v1273 = vsub.f32 %v1241, %v1253
        %v1274 = vsub.f32 %v1242, %v1256
        %v1275 = vsub.f32 %v1243, %v1259
        %v1276 = vsub.f32 %v1244, %v1262
        %v1277 = vsub.f32 %v1245, %v1265
        %v1278 = vsub.f32 %v1246, %v1268
        %v1279 = vsub.f32 %v1247, %v1271
        %v1280 = vmul.f32 %v1272, 1.442695
        %v1281 = vpow.pop %v1280
        %v1282 = vmul.f32 %v1273, 1.442695
        %v1283 = vpow.pop %v1282
        %v1284 = vmul.f32 %v1274, 1.442695
        %v1285 = vpow.pop %v1284
        %v1286 = vmul.f32 %v1275, 1.442695
        %v1287 = vpow.pop %v1286
        %v1288 = vmul.f32 %v1276, 1.442695
        %v1289 = vpow.pop %v1288
        %v1290 = vmul.f32 %v1277, 1.442695
        %v1291 = vpow.pop %v1290
        %v1292 = vmul.f32 %v1278, 1.442695
        %v1293 = vpow.pop %v1292
        %v1294 = vmul.f32 %v1279, 1.442695
        %v1295 = vpow.pop %v1294
        %v1296 = vsel %vm633, %v1281, 0.0
        %1297 = vadd.xlane.f32.xlu0 %v1296
        %v1298 = vpop.xlane.xlu0 %1297
        %v1299 = vsel %vm633, %v1283, 0.0
        %1300 = vadd.xlane.f32.xlu0 %v1299
        %v1301 = vpop.xlane.xlu0 %1300
        %v1302 = vsel %vm633, %v1285, 0.0
        %1303 = vadd.xlane.f32.xlu0 %v1302
        %v1304 = vpop.xlane.xlu0 %1303
        %v1305 = vsel %vm633, %v1287, 0.0
        %1306 = vadd.xlane.f32.xlu0 %v1305
        %v1307 = vpop.xlane.xlu0 %1306
        %v1308 = vsel %vm633, %v1289, 0.0
        %1309 = vadd.xlane.f32.xlu0 %v1308
        %v1310 = vpop.xlane.xlu0 %1309
        %v1311 = vsel %vm633, %v1291, 0.0
        %1312 = vadd.xlane.f32.xlu0 %v1311
        %v1313 = vpop.xlane.xlu0 %1312
        %v1314 = vsel %vm633, %v1293, 0.0
        %1315 = vadd.xlane.f32.xlu0 %v1314
        %v1316 = vpop.xlane.xlu0 %1315
        %v1317 = vsel %vm633, %v1295, 0.0
        %1318 = vadd.xlane.f32.xlu0 %v1317
        %v1319 = vpop.xlane.xlu0 %1318
        %v1320 = vrcp.pop %v1298
        %v1321 = vrcp.pop %v1301
        %v1322 = vrcp.pop %v1304
        %v1323 = vrcp.pop %v1307
        %v1324 = vrcp.pop %v1310
        %v1325 = vrcp.pop %v1313
        %v1326 = vrcp.pop %v1316
        %v1327 = vrcp.pop %v1319
        %v1328 = vmul.f32 %v1281, %v1320
        %v1329 = vmul.f32 %v1283, %v1321
        %v1330 = vmul.f32 %v1285, %v1322
        %v1331 = vmul.f32 %v1287, %v1323
        %v1332 = vmul.f32 %v1289, %v1324
        %v1333 = vmul.f32 %v1291, %v1325
        %v1334 = vmul.f32 %v1293, %v1326
        %v1335 = vmul.f32 %v1295, %v1327
        %1336 = vrot.lane.b32.xlu0 %v615, 64
        %v1337 = vpop.permute.xlu0 %1336
        %v1340 = vsel %vm633, %v1328, 0
        %1342 = vmatprep.subr.mxu0 0.0
        %1343 = vmatpush1.msra.mxu0 0.0
        %1344 = vmatprep.subr.mxu0 0.0
        %1345 = vmatpush1.msra.mxu0 0.0
        %1346 = vmatprep.subr.mxu0 0.0
        %1347 = vmatpush1.msra.mxu0 0.0
        %1348 = vmatprep.subr.mxu0 0.0
        %1349 = vmatpush1.msra.mxu0 0.0
        %1350 = vmatprep.subr.mxu0 0.0
        %1351 = vmatpush1.msra.mxu0 0.0
        %1352 = vmatprep.subr.mxu0 0.0
        %1353 = vmatpush1.msra.mxu0 0.0
        %1354 = vmatprep.subr.mxu0 0.0
        %1355 = vmatpush1.msra.mxu0 0.0
        %1356 = vmatprep.subr.mxu0 0.0
        %1357 = vmatpush1.msra.mxu0 0.0
        %1358 = vmatprep.subr.mxu0 0.0
        %1359 = vmatpush1.msra.mxu0 0.0
        %1360 = vmatprep.subr.mxu0 0.0
        %1361 = vmatpush1.msra.mxu0 0.0
        %1362 = vmatprep.subr.mxu0 0.0
        %1363 = vmatpush1.msra.mxu0 0.0
        %1364 = vmatprep.subr.mxu0 0.0
        %1365 = vmatpush1.msra.mxu0 0.0
        %1366 = vmatprep.subr.mxu0 0.0
        %1367 = vmatpush1.msra.mxu0 0.0
        %1368 = vmatprep.subr.mxu0 0.0
        %1369 = vmatpush1.msra.mxu0 0.0
        %1370 = vmatprep.subr.mxu0 0.0
        %1371 = vmatpush1.msra.mxu0 0.0
        %1372 = vmatprep.subr.mxu0 0.0
        %1373 = vmatpush1.msra.mxu0 %v1337
        %1374 = vmatprep.subr.mxu0 0.0
        %1375 = vmatpush2.msra.mxu0 0.0
        %1376 = vmatprep.subr.mxu0 0.0
        %1377 = vmatpush2.msra.mxu0 0.0
        %1378 = vmatprep.subr.mxu0 0.0
        %1379 = vmatpush2.msra.mxu0 0.0
        %1380 = vmatprep.subr.mxu0 0.0
        %1381 = vmatpush2.msra.mxu0 0.0
        %1382 = vmatprep.subr.mxu0 0.0
        %1383 = vmatpush2.msra.mxu0 0.0
        %1384 = vmatprep.subr.mxu0 0.0
        %1385 = vmatpush2.msra.mxu0 0.0
        %1386 = vmatprep.subr.mxu0 0.0
        %1387 = vmatpush2.msra.mxu0 0.0
        %1388 = vmatprep.subr.mxu0 0.0
        %1389 = vmatpush2.msra.mxu0 0.0
        %1390 = vmatprep.subr.mxu0 0.0
        %1391 = vmatpush2.msra.mxu0 0.0
        %1392 = vmatprep.subr.mxu0 0.0
        %1393 = vmatpush2.msra.mxu0 0.0
        %1394 = vmatprep.subr.mxu0 0.0
        %1395 = vmatpush2.msra.mxu0 0.0
        %1396 = vmatprep.subr.mxu0 0.0
        %1397 = vmatpush2.msra.mxu0 0.0
        %1398 = vmatprep.subr.mxu0 0.0
        %1399 = vmatpush2.msra.mxu0 0.0
        %1400 = vmatprep.subr.mxu0 0.0
        %1401 = vmatpush2.msra.mxu0 0.0
        %1402 = vmatprep.subr.mxu0 0.0
        %1403 = vmatpush2.msra.mxu0 0.0
        %1404 = vmatprep.subr.mxu0 0.0
        %1405 = vmatpush2.msra.mxu0 0.0
        %1406 = vmatprep.mubr.f32.mxu0 0.0
        %1407 = vmatmul.mubr.f32.gmra.mxu0 %v1340
        %v1408 = vpop.f32.mrf.mxu0
        %v1409 = vadd.f32 0.0, %v1408
        %v1410 = vpop.f32.mrf.mxu0
        %1411 = vdwg.mxu0
        %1412 = vrot.lane.b32.xlu0 %v616, 64
        %v1413 = vpop.permute.xlu0 %1412
        %v1416 = vsel %vm633, %v1329, 0
        %1418 = vmatprep.subr.mxu0 0.0
        %1419 = vmatpush1.msra.mxu0 0.0
        %1420 = vmatprep.subr.mxu0 0.0
        %1421 = vmatpush1.msra.mxu0 0.0
        %1422 = vmatprep.subr.mxu0 0.0
        %1423 = vmatpush1.msra.mxu0 0.0
        %1424 = vmatprep.subr.mxu0 0.0
        %1425 = vmatpush1.msra.mxu0 0.0
        %1426 = vmatprep.subr.mxu0 0.0
        %1427 = vmatpush1.msra.mxu0 0.0
        %1428 = vmatprep.subr.mxu0 0.0
        %1429 = vmatpush1.msra.mxu0 0.0
        %1430 = vmatprep.subr.mxu0 0.0
        %1431 = vmatpush1.msra.mxu0 0.0
        %1432 = vmatprep.subr.mxu0 0.0
        %1433 = vmatpush1.msra.mxu0 0.0
        %1434 = vmatprep.subr.mxu0 0.0
        %1435 = vmatpush1.msra.mxu0 0.0
        %1436 = vmatprep.subr.mxu0 0.0
        %1437 = vmatpush1.msra.mxu0 0.0
        %1438 = vmatprep.subr.mxu0 0.0
        %1439 = vmatpush1.msra.mxu0 0.0
        %1440 = vmatprep.subr.mxu0 0.0
        %1441 = vmatpush1.msra.mxu0 0.0
        %1442 = vmatprep.subr.mxu0 0.0
        %1443 = vmatpush1.msra.mxu0 0.0
        %1444 = vmatprep.subr.mxu0 0.0
        %1445 = vmatpush1.msra.mxu0 0.0
        %1446 = vmatprep.subr.mxu0 0.0
        %1447 = vmatpush1.msra.mxu0 0.0
        %1448 = vmatprep.subr.mxu0 0.0
        %1449 = vmatpush1.msra.mxu0 %v1413
        %1450 = vmatprep.subr.mxu0 0.0
        %1451 = vmatpush2.msra.mxu0 0.0
        %1452 = vmatprep.subr.mxu0 0.0
        %1453 = vmatpush2.msra.mxu0 0.0
        %1454 = vmatprep.subr.mxu0 0.0
        %1455 = vmatpush2.msra.mxu0 0.0
        %1456 = vmatprep.subr.mxu0 0.0
        %1457 = vmatpush2.msra.mxu0 0.0
        %1458 = vmatprep.subr.mxu0 0.0
        %1459 = vmatpush2.msra.mxu0 0.0
        %1460 = vmatprep.subr.mxu0 0.0
        %1461 = vmatpush2.msra.mxu0 0.0
        %1462 = vmatprep.subr.mxu0 0.0
        %1463 = vmatpush2.msra.mxu0 0.0
        %1464 = vmatprep.subr.mxu0 0.0
        %1465 = vmatpush2.msra.mxu0 0.0
        %1466 = vmatprep.subr.mxu0 0.0
        %1467 = vmatpush2.msra.mxu0 0.0
        %1468 = vmatprep.subr.mxu0 0.0
        %1469 = vmatpush2.msra.mxu0 0.0
        %1470 = vmatprep.subr.mxu0 0.0
        %1471 = vmatpush2.msra.mxu0 0.0
        %1472 = vmatprep.subr.mxu0 0.0
        %1473 = vmatpush2.msra.mxu0 0.0
        %1474 = vmatprep.subr.mxu0 0.0
        %1475 = vmatpush2.msra.mxu0 0.0
        %1476 = vmatprep.subr.mxu0 0.0
        %1477 = vmatpush2.msra.mxu0 0.0
        %1478 = vmatprep.subr.mxu0 0.0
        %1479 = vmatpush2.msra.mxu0 0.0
        %1480 = vmatprep.subr.mxu0 0.0
        %1481 = vmatpush2.msra.mxu0 0.0
        %1482 = vmatprep.mubr.f32.mxu0 0.0
        %1483 = vmatmul.mubr.f32.gmra.mxu0 %v1416
        %v1484 = vpop.f32.mrf.mxu0
        %v1485 = vadd.f32 0.0, %v1484
        %v1486 = vpop.f32.mrf.mxu0
        %1487 = vdwg.mxu0
        %1488 = vrot.lane.b32.xlu0 %v620, 64
        %v1489 = vpop.permute.xlu0 %1488
        %v1492 = vsel %vm633, %v1330, 0
        %1494 = vmatprep.subr.mxu0 0.0
        %1495 = vmatpush1.msra.mxu0 0.0
        %1496 = vmatprep.subr.mxu0 0.0
        %1497 = vmatpush1.msra.mxu0 0.0
        %1498 = vmatprep.subr.mxu0 0.0
        %1499 = vmatpush1.msra.mxu0 0.0
        %1500 = vmatprep.subr.mxu0 0.0
        %1501 = vmatpush1.msra.mxu0 0.0
        %1502 = vmatprep.subr.mxu0 0.0
        %1503 = vmatpush1.msra.mxu0 0.0
        %1504 = vmatprep.subr.mxu0 0.0
        %1505 = vmatpush1.msra.mxu0 0.0
        %1506 = vmatprep.subr.mxu0 0.0
        %1507 = vmatpush1.msra.mxu0 0.0
        %1508 = vmatprep.subr.mxu0 0.0
        %1509 = vmatpush1.msra.mxu0 0.0
        %1510 = vmatprep.subr.mxu0 0.0
        %1511 = vmatpush1.msra.mxu0 0.0
        %1512 = vmatprep.subr.mxu0 0.0
        %1513 = vmatpush1.msra.mxu0 0.0
        %1514 = vmatprep.subr.mxu0 0.0
        %1515 = vmatpush1.msra.mxu0 0.0
        %1516 = vmatprep.subr.mxu0 0.0
        %1517 = vmatpush1.msra.mxu0 0.0
        %1518 = vmatprep.subr.mxu0 0.0
        %1519 = vmatpush1.msra.mxu0 0.0
        %1520 = vmatprep.subr.mxu0 0.0
        %1521 = vmatpush1.msra.mxu0 0.0
        %1522 = vmatprep.subr.mxu0 0.0
        %1523 = vmatpush1.msra.mxu0 0.0
        %1524 = vmatprep.subr.mxu0 0.0
        %1525 = vmatpush1.msra.mxu0 %v1489
        %1526 = vmatprep.subr.mxu0 0.0
        %1527 = vmatpush2.msra.mxu0 0.0
        %1528 = vmatprep.subr.mxu0 0.0
        %1529 = vmatpush2.msra.mxu0 0.0
        %1530 = vmatprep.subr.mxu0 0.0
        %1531 = vmatpush2.msra.mxu0 0.0
        %1532 = vmatprep.subr.mxu0 0.0
        %1533 = vmatpush2.msra.mxu0 0.0
        %1534 = vmatprep.subr.mxu0 0.0
        %1535 = vmatpush2.msra.mxu0 0.0
        %1536 = vmatprep.subr.mxu0 0.0
        %1537 = vmatpush2.msra.mxu0 0.0
        %1538 = vmatprep.subr.mxu0 0.0
        %1539 = vmatpush2.msra.mxu0 0.0
        %1540 = vmatprep.subr.mxu0 0.0
        %1541 = vmatpush2.msra.mxu0 0.0
        %1542 = vmatprep.subr.mxu0 0.0
        %1543 = vmatpush2.msra.mxu0 0.0
        %1544 = vmatprep.subr.mxu0 0.0
        %1545 = vmatpush2.msra.mxu0 0.0
        %1546 = vmatprep.subr.mxu0 0.0
        %1547 = vmatpush2.msra.mxu0 0.0
        %1548 = vmatprep.subr.mxu0 0.0
        %1549 = vmatpush2.msra.mxu0 0.0
        %1550 = vmatprep.subr.mxu0 0.0
        %1551 = vmatpush2.msra.mxu0 0.0
        %1552 = vmatprep.subr.mxu0 0.0
        %1553 = vmatpush2.msra.mxu0 0.0
        %1554 = vmatprep.subr.mxu0 0.0
        %1555 = vmatpush2.msra.mxu0 0.0
        %1556 = vmatprep.subr.mxu0 0.0
        %1557 = vmatpush2.msra.mxu0 0.0
        %1558 = vmatprep.mubr.f32.mxu0 0.0
        %1559 = vmatmul.mubr.f32.gmra.mxu0 %v1492
        %v1560 = vpop.f32.mrf.mxu0
        %v1561 = vadd.f32 0.0, %v1560
        %v1562 = vpop.f32.mrf.mxu0
        %1563 = vdwg.mxu0
        %1564 = vrot.lane.b32.xlu0 %v622, 64
        %v1565 = vpop.permute.xlu0 %1564
        %v1568 = vsel %vm633, %v1331, 0
        %1570 = vmatprep.subr.mxu0 0.0
        %1571 = vmatpush1.msra.mxu0 0.0
        %1572 = vmatprep.subr.mxu0 0.0
        %1573 = vmatpush1.msra.mxu0 0.0
        %1574 = vmatprep.subr.mxu0 0.0
        %1575 = vmatpush1.msra.mxu0 0.0
        %1576 = vmatprep.subr.mxu0 0.0
        %1577 = vmatpush1.msra.mxu0 0.0
        %1578 = vmatprep.subr.mxu0 0.0
        %1579 = vmatpush1.msra.mxu0 0.0
        %1580 = vmatprep.subr.mxu0 0.0
        %1581 = vmatpush1.msra.mxu0 0.0
        %1582 = vmatprep.subr.mxu0 0.0
        %1583 = vmatpush1.msra.mxu0 0.0
        %1584 = vmatprep.subr.mxu0 0.0
        %1585 = vmatpush1.msra.mxu0 0.0
        %1586 = vmatprep.subr.mxu0 0.0
        %1587 = vmatpush1.msra.mxu0 0.0
        %1588 = vmatprep.subr.mxu0 0.0
        %1589 = vmatpush1.msra.mxu0 0.0
        %1590 = vmatprep.subr.mxu0 0.0
        %1591 = vmatpush1.msra.mxu0 0.0
        %1592 = vmatprep.subr.mxu0 0.0
        %1593 = vmatpush1.msra.mxu0 0.0
        %1594 = vmatprep.subr.mxu0 0.0
        %1595 = vmatpush1.msra.mxu0 0.0
        %1596 = vmatprep.subr.mxu0 0.0
        %1597 = vmatpush1.msra.mxu0 0.0
        %1598 = vmatprep.subr.mxu0 0.0
        %1599 = vmatpush1.msra.mxu0 0.0
        %1600 = vmatprep.subr.mxu0 0.0
        %1601 = vmatpush1.msra.mxu0 %v1565
        %1602 = vmatprep.subr.mxu0 0.0
        %1603 = vmatpush2.msra.mxu0 0.0
        %1604 = vmatprep.subr.mxu0 0.0
        %1605 = vmatpush2.msra.mxu0 0.0
        %1606 = vmatprep.subr.mxu0 0.0
        %1607 = vmatpush2.msra.mxu0 0.0
        %1608 = vmatprep.subr.mxu0 0.0
        %1609 = vmatpush2.msra.mxu0 0.0
        %1610 = vmatprep.subr.mxu0 0.0
        %1611 = vmatpush2.msra.mxu0 0.0
        %1612 = vmatprep.subr.mxu0 0.0
        %1613 = vmatpush2.msra.mxu0 0.0
        %1614 = vmatprep.subr.mxu0 0.0
        %1615 = vmatpush2.msra.mxu0 0.0
        %1616 = vmatprep.subr.mxu0 0.0
        %1617 = vmatpush2.msra.mxu0 0.0
        %1618 = vmatprep.subr.mxu0 0.0
        %1619 = vmatpush2.msra.mxu0 0.0
        %1620 = vmatprep.subr.mxu0 0.0
        %1621 = vmatpush2.msra.mxu0 0.0
        %1622 = vmatprep.subr.mxu0 0.0
        %1623 = vmatpush2.msra.mxu0 0.0
        %1624 = vmatprep.subr.mxu0 0.0
        %1625 = vmatpush2.msra.mxu0 0.0
        %1626 = vmatprep.subr.mxu0 0.0
        %1627 = vmatpush2.msra.mxu0 0.0
        %1628 = vmatprep.subr.mxu0 0.0
        %1629 = vmatpush2.msra.mxu0 0.0
        %1630 = vmatprep.subr.mxu0 0.0
        %1631 = vmatpush2.msra.mxu0 0.0
        %1632 = vmatprep.subr.mxu0 0.0
        %1633 = vmatpush2.msra.mxu0 0.0
        %1634 = vmatprep.mubr.f32.mxu0 0.0
        %1635 = vmatmul.mubr.f32.gmra.mxu0 %v1568
        %v1636 = vpop.f32.mrf.mxu0
        %v1637 = vadd.f32 0.0, %v1636
        %v1638 = vpop.f32.mrf.mxu0
        %1639 = vdwg.mxu0
        %1640 = vrot.lane.b32.xlu0 %v624, 64
        %v1641 = vpop.permute.xlu0 %1640
        %v1644 = vsel %vm633, %v1332, 0
        %1646 = vmatprep.subr.mxu0 0.0
        %1647 = vmatpush1.msra.mxu0 0.0
        %1648 = vmatprep.subr.mxu0 0.0
        %1649 = vmatpush1.msra.mxu0 0.0
        %1650 = vmatprep.subr.mxu0 0.0
        %1651 = vmatpush1.msra.mxu0 0.0
        %1652 = vmatprep.subr.mxu0 0.0
        %1653 = vmatpush1.msra.mxu0 0.0
        %1654 = vmatprep.subr.mxu0 0.0
        %1655 = vmatpush1.msra.mxu0 0.0
        %1656 = vmatprep.subr.mxu0 0.0
        %1657 = vmatpush1.msra.mxu0 0.0
        %1658 = vmatprep.subr.mxu0 0.0
        %1659 = vmatpush1.msra.mxu0 0.0
        %1660 = vmatprep.subr.mxu0 0.0
        %1661 = vmatpush1.msra.mxu0 0.0
        %1662 = vmatprep.subr.mxu0 0.0
        %1663 = vmatpush1.msra.mxu0 0.0
        %1664 = vmatprep.subr.mxu0 0.0
        %1665 = vmatpush1.msra.mxu0 0.0
        %1666 = vmatprep.subr.mxu0 0.0
        %1667 = vmatpush1.msra.mxu0 0.0
        %1668 = vmatprep.subr.mxu0 0.0
        %1669 = vmatpush1.msra.mxu0 0.0
        %1670 = vmatprep.subr.mxu0 0.0
        %1671 = vmatpush1.msra.mxu0 0.0
        %1672 = vmatprep.subr.mxu0 0.0
        %1673 = vmatpush1.msra.mxu0 0.0
        %1674 = vmatprep.subr.mxu0 0.0
        %1675 = vmatpush1.msra.mxu0 0.0
        %1676 = vmatprep.subr.mxu0 0.0
        %1677 = vmatpush1.msra.mxu0 %v1641
        %1678 = vmatprep.subr.mxu0 0.0
        %1679 = vmatpush2.msra.mxu0 0.0
        %1680 = vmatprep.subr.mxu0 0.0
        %1681 = vmatpush2.msra.mxu0 0.0
        %1682 = vmatprep.subr.mxu0 0.0
        %1683 = vmatpush2.msra.mxu0 0.0
        %1684 = vmatprep.subr.mxu0 0.0
        %1685 = vmatpush2.msra.mxu0 0.0
        %1686 = vmatprep.subr.mxu0 0.0
        %1687 = vmatpush2.msra.mxu0 0.0
        %1688 = vmatprep.subr.mxu0 0.0
        %1689 = vmatpush2.msra.mxu0 0.0
        %1690 = vmatprep.subr.mxu0 0.0
        %1691 = vmatpush2.msra.mxu0 0.0
        %1692 = vmatprep.subr.mxu0 0.0
        %1693 = vmatpush2.msra.mxu0 0.0
        %1694 = vmatprep.subr.mxu0 0.0
        %1695 = vmatpush2.msra.mxu0 0.0
        %1696 = vmatprep.subr.mxu0 0.0
        %1697 = vmatpush2.msra.mxu0 0.0
        %1698 = vmatprep.subr.mxu0 0.0
        %1699 = vmatpush2.msra.mxu0 0.0
        %1700 = vmatprep.subr.mxu0 0.0
        %1701 = vmatpush2.msra.mxu0 0.0
        %1702 = vmatprep.subr.mxu0 0.0
        %1703 = vmatpush2.msra.mxu0 0.0
        %1704 = vmatprep.subr.mxu0 0.0
        %1705 = vmatpush2.msra.mxu0 0.0
        %1706 = vmatprep.subr.mxu0 0.0
        %1707 = vmatpush2.msra.mxu0 0.0
        %1708 = vmatprep.subr.mxu0 0.0
        %1709 = vmatpush2.msra.mxu0 0.0
        %1710 = vmatprep.mubr.f32.mxu0 0.0
        %1711 = vmatmul.mubr.f32.gmra.mxu0 %v1644
        %v1712 = vpop.f32.mrf.mxu0
        %v1713 = vadd.f32 0.0, %v1712
        %v1714 = vpop.f32.mrf.mxu0
        %1715 = vdwg.mxu0
        %1716 = vrot.lane.b32.xlu0 %v626, 64
        %v1717 = vpop.permute.xlu0 %1716
        %v1720 = vsel %vm633, %v1333, 0
        %1722 = vmatprep.subr.mxu0 0.0
        %1723 = vmatpush1.msra.mxu0 0.0
        %1724 = vmatprep.subr.mxu0 0.0
        %1725 = vmatpush1.msra.mxu0 0.0
        %1726 = vmatprep.subr.mxu0 0.0
        %1727 = vmatpush1.msra.mxu0 0.0
        %1728 = vmatprep.subr.mxu0 0.0
        %1729 = vmatpush1.msra.mxu0 0.0
        %1730 = vmatprep.subr.mxu0 0.0
        %1731 = vmatpush1.msra.mxu0 0.0
        %1732 = vmatprep.subr.mxu0 0.0
        %1733 = vmatpush1.msra.mxu0 0.0
        %1734 = vmatprep.subr.mxu0 0.0
        %1735 = vmatpush1.msra.mxu0 0.0
        %1736 = vmatprep.subr.mxu0 0.0
        %1737 = vmatpush1.msra.mxu0 0.0
        %1738 = vmatprep.subr.mxu0 0.0
        %1739 = vmatpush1.msra.mxu0 0.0
        %1740 = vmatprep.subr.mxu0 0.0
        %1741 = vmatpush1.msra.mxu0 0.0
        %1742 = vmatprep.subr.mxu0 0.0
        %1743 = vmatpush1.msra.mxu0 0.0
        %1744 = vmatprep.subr.mxu0 0.0
        %1745 = vmatpush1.msra.mxu0 0.0
        %1746 = vmatprep.subr.mxu0 0.0
        %1747 = vmatpush1.msra.mxu0 0.0
        %1748 = vmatprep.subr.mxu0 0.0
        %1749 = vmatpush1.msra.mxu0 0.0
        %1750 = vmatprep.subr.mxu0 0.0
        %1751 = vmatpush1.msra.mxu0 0.0
        %1752 = vmatprep.subr.mxu0 0.0
        %1753 = vmatpush1.msra.mxu0 %v1717
        %1754 = vmatprep.subr.mxu0 0.0
        %1755 = vmatpush2.msra.mxu0 0.0
        %1756 = vmatprep.subr.mxu0 0.0
        %1757 = vmatpush2.msra.mxu0 0.0
        %1758 = vmatprep.subr.mxu0 0.0
        %1759 = vmatpush2.msra.mxu0 0.0
        %1760 = vmatprep.subr.mxu0 0.0
        %1761 = vmatpush2.msra.mxu0 0.0
        %1762 = vmatprep.subr.mxu0 0.0
        %1763 = vmatpush2.msra.mxu0 0.0
        %1764 = vmatprep.subr.mxu0 0.0
        %1765 = vmatpush2.msra.mxu0 0.0
        %1766 = vmatprep.subr.mxu0 0.0
        %1767 = vmatpush2.msra.mxu0 0.0
        %1768 = vmatprep.subr.mxu0 0.0
        %1769 = vmatpush2.msra.mxu0 0.0
        %1770 = vmatprep.subr.mxu0 0.0
        %1771 = vmatpush2.msra.mxu0 0.0
        %1772 = vmatprep.subr.mxu0 0.0
        %1773 = vmatpush2.msra.mxu0 0.0
        %1774 = vmatprep.subr.mxu0 0.0
        %1775 = vmatpush2.msra.mxu0 0.0
        %1776 = vmatprep.subr.mxu0 0.0
        %1777 = vmatpush2.msra.mxu0 0.0
        %1778 = vmatprep.subr.mxu0 0.0
        %1779 = vmatpush2.msra.mxu0 0.0
        %1780 = vmatprep.subr.mxu0 0.0
        %1781 = vmatpush2.msra.mxu0 0.0
        %1782 = vmatprep.subr.mxu0 0.0
        %1783 = vmatpush2.msra.mxu0 0.0
        %1784 = vmatprep.subr.mxu0 0.0
        %1785 = vmatpush2.msra.mxu0 0.0
        %1786 = vmatprep.mubr.f32.mxu0 0.0
        %1787 = vmatmul.mubr.f32.gmra.mxu0 %v1720
        %v1788 = vpop.f32.mrf.mxu0
        %v1789 = vadd.f32 0.0, %v1788
        %v1790 = vpop.f32.mrf.mxu0
        %1791 = vdwg.mxu0
        %1792 = vrot.lane.b32.xlu0 %v628, 64
        %v1793 = vpop.permute.xlu0 %1792
        %v1796 = vsel %vm633, %v1334, 0
        %1798 = vmatprep.subr.mxu0 0.0
        %1799 = vmatpush1.msra.mxu0 0.0
        %1800 = vmatprep.subr.mxu0 0.0
        %1801 = vmatpush1.msra.mxu0 0.0
        %1802 = vmatprep.subr.mxu0 0.0
        %1803 = vmatpush1.msra.mxu0 0.0
        %1804 = vmatprep.subr.mxu0 0.0
        %1805 = vmatpush1.msra.mxu0 0.0
        %1806 = vmatprep.subr.mxu0 0.0
        %1807 = vmatpush1.msra.mxu0 0.0
        %1808 = vmatprep.subr.mxu0 0.0
        %1809 = vmatpush1.msra.mxu0 0.0
        %1810 = vmatprep.subr.mxu0 0.0
        %1811 = vmatpush1.msra.mxu0 0.0
        %1812 = vmatprep.subr.mxu0 0.0
        %1813 = vmatpush1.msra.mxu0 0.0
        %1814 = vmatprep.subr.mxu0 0.0
        %1815 = vmatpush1.msra.mxu0 0.0
        %1816 = vmatprep.subr.mxu0 0.0
        %1817 = vmatpush1.msra.mxu0 0.0
        %1818 = vmatprep.subr.mxu0 0.0
        %1819 = vmatpush1.msra.mxu0 0.0
        %1820 = vmatprep.subr.mxu0 0.0
        %1821 = vmatpush1.msra.mxu0 0.0
        %1822 = vmatprep.subr.mxu0 0.0
        %1823 = vmatpush1.msra.mxu0 0.0
        %1824 = vmatprep.subr.mxu0 0.0
        %1825 = vmatpush1.msra.mxu0 0.0
        %1826 = vmatprep.subr.mxu0 0.0
        %1827 = vmatpush1.msra.mxu0 0.0
        %1828 = vmatprep.subr.mxu0 0.0
        %1829 = vmatpush1.msra.mxu0 %v1793
        %1830 = vmatprep.subr.mxu0 0.0
        %1831 = vmatpush2.msra.mxu0 0.0
        %1832 = vmatprep.subr.mxu0 0.0
        %1833 = vmatpush2.msra.mxu0 0.0
        %1834 = vmatprep.subr.mxu0 0.0
        %1835 = vmatpush2.msra.mxu0 0.0
        %1836 = vmatprep.subr.mxu0 0.0
        %1837 = vmatpush2.msra.mxu0 0.0
        %1838 = vmatprep.subr.mxu0 0.0
        %1839 = vmatpush2.msra.mxu0 0.0
        %1840 = vmatprep.subr.mxu0 0.0
        %1841 = vmatpush2.msra.mxu0 0.0
        %1842 = vmatprep.subr.mxu0 0.0
        %1843 = vmatpush2.msra.mxu0 0.0
        %1844 = vmatprep.subr.mxu0 0.0
        %1845 = vmatpush2.msra.mxu0 0.0
        %1846 = vmatprep.subr.mxu0 0.0
        %1847 = vmatpush2.msra.mxu0 0.0
        %1848 = vmatprep.subr.mxu0 0.0
        %1849 = vmatpush2.msra.mxu0 0.0
        %1850 = vmatprep.subr.mxu0 0.0
        %1851 = vmatpush2.msra.mxu0 0.0
        %1852 = vmatprep.subr.mxu0 0.0
        %1853 = vmatpush2.msra.mxu0 0.0
        %1854 = vmatprep.subr.mxu0 0.0
        %1855 = vmatpush2.msra.mxu0 0.0
        %1856 = vmatprep.subr.mxu0 0.0
        %1857 = vmatpush2.msra.mxu0 0.0
        %1858 = vmatprep.subr.mxu0 0.0
        %1859 = vmatpush2.msra.mxu0 0.0
        %1860 = vmatprep.subr.mxu0 0.0
        %1861 = vmatpush2.msra.mxu0 0.0
        %1862 = vmatprep.mubr.f32.mxu0 0.0
        %1863 = vmatmul.mubr.f32.gmra.mxu0 %v1796
        %v1864 = vpop.f32.mrf.mxu0
        %v1865 = vadd.f32 0.0, %v1864
        %v1866 = vpop.f32.mrf.mxu0
        %1867 = vdwg.mxu0
        %1868 = vrot.lane.b32.xlu0 %v630, 64
        %v1869 = vpop.permute.xlu0 %1868
        %v1872 = vsel %vm633, %v1335, 0
        %1874 = vmatprep.subr.mxu0 0.0
        %1875 = vmatpush1.msra.mxu0 0.0
        %1876 = vmatprep.subr.mxu0 0.0
        %1877 = vmatpush1.msra.mxu0 0.0
        %1878 = vmatprep.subr.mxu0 0.0
        %1879 = vmatpush1.msra.mxu0 0.0
        %1880 = vmatprep.subr.mxu0 0.0
        %1881 = vmatpush1.msra.mxu0 0.0
        %1882 = vmatprep.subr.mxu0 0.0
        %1883 = vmatpush1.msra.mxu0 0.0
        %1884 = vmatprep.subr.mxu0 0.0
        %1885 = vmatpush1.msra.mxu0 0.0
        %1886 = vmatprep.subr.mxu0 0.0
        %1887 = vmatpush1.msra.mxu0 0.0
        %1888 = vmatprep.subr.mxu0 0.0
        %1889 = vmatpush1.msra.mxu0 0.0
        %1890 = vmatprep.subr.mxu0 0.0
        %1891 = vmatpush1.msra.mxu0 0.0
        %1892 = vmatprep.subr.mxu0 0.0
        %1893 = vmatpush1.msra.mxu0 0.0
        %1894 = vmatprep.subr.mxu0 0.0
        %1895 = vmatpush1.msra.mxu0 0.0
        %1896 = vmatprep.subr.mxu0 0.0
        %1897 = vmatpush1.msra.mxu0 0.0
        %1898 = vmatprep.subr.mxu0 0.0
        %1899 = vmatpush1.msra.mxu0 0.0
        %1900 = vmatprep.subr.mxu0 0.0
        %1901 = vmatpush1.msra.mxu0 0.0
        %1902 = vmatprep.subr.mxu0 0.0
        %1903 = vmatpush1.msra.mxu0 0.0
        %1904 = vmatprep.subr.mxu0 0.0
        %1905 = vmatpush1.msra.mxu0 %v1869
        %1906 = vmatprep.subr.mxu0 0.0
        %1907 = vmatpush2.msra.mxu0 0.0
        %1908 = vmatprep.subr.mxu0 0.0
        %1909 = vmatpush2.msra.mxu0 0.0
        %1910 = vmatprep.subr.mxu0 0.0
        %1911 = vmatpush2.msra.mxu0 0.0
        %1912 = vmatprep.subr.mxu0 0.0
        %1913 = vmatpush2.msra.mxu0 0.0
        %1914 = vmatprep.subr.mxu0 0.0
        %1915 = vmatpush2.msra.mxu0 0.0
        %1916 = vmatprep.subr.mxu0 0.0
        %1917 = vmatpush2.msra.mxu0 0.0
        %1918 = vmatprep.subr.mxu0 0.0
        %1919 = vmatpush2.msra.mxu0 0.0
        %1920 = vmatprep.subr.mxu0 0.0
        %1921 = vmatpush2.msra.mxu0 0.0
        %1922 = vmatprep.subr.mxu0 0.0
        %1923 = vmatpush2.msra.mxu0 0.0
        %1924 = vmatprep.subr.mxu0 0.0
        %1925 = vmatpush2.msra.mxu0 0.0
        %1926 = vmatprep.subr.mxu0 0.0
        %1927 = vmatpush2.msra.mxu0 0.0
        %1928 = vmatprep.subr.mxu0 0.0
        %1929 = vmatpush2.msra.mxu0 0.0
        %1930 = vmatprep.subr.mxu0 0.0
        %1931 = vmatpush2.msra.mxu0 0.0
        %1932 = vmatprep.subr.mxu0 0.0
        %1933 = vmatpush2.msra.mxu0 0.0
        %1934 = vmatprep.subr.mxu0 0.0
        %1935 = vmatpush2.msra.mxu0 0.0
        %1936 = vmatprep.subr.mxu0 0.0
        %1937 = vmatpush2.msra.mxu0 0.0
        %1938 = vmatprep.mubr.f32.mxu0 0.0
        %1939 = vmatmul.mubr.f32.gmra.mxu0 %v1872
        %v1940 = vpop.f32.mrf.mxu0
        %v1941 = vadd.f32 0.0, %v1940
        %v1942 = vpop.f32.mrf.mxu0
        %1943 = vdwg.mxu0
        %1946 = vrot.lane.b32.xlu0 %v1561, 8
        %v1947 = vpop.permute.xlu0 %1946
        %1948 = vrot.lane.b32.xlu0 %v1637, 8
        %v1949 = vpop.permute.xlu0 %1948
        %1954 = vrot.lane.b32.xlu0 %v1713, 16
        %v1955 = vpop.permute.xlu0 %1954
        %1956 = vrot.lane.b32.xlu0 %v1789, 16
        %v1957 = vpop.permute.xlu0 %1956
        %1962 = vrot.lane.b32.xlu0 %v1865, 24
        %v1963 = vpop.permute.xlu0 %1962
        %1964 = vrot.lane.b32.xlu0 %v1941, 24
        %v1965 = vpop.permute.xlu0 %1964
        %v1968 = vsel %vm633, %v1409, %v1947
        %v1969 = vsel %vm633, %v1485, %v1949
        %vm1970 = vcmask 130048
        %v1971 = vsel %vm1970, %v1968, %v1955
        %v1972 = vsel %vm1970, %v1969, %v1957
        %vm1973 = vcmask 195584
        %v1974 = vsel %vm1973, %v1971, %v1963
        %v1975 = vsel %vm1973, %v1972, %v1965
        %v1976 = vadd.f32 %v1974, %v520
        %v1977 = vadd.f32 %v1975, %v521
        %v1978 = vld [vmem:[%s485] sm:$0x1]
        %v1979 = vld [vmem:[%s488] sm:$0x1]
        %v1980 = vsel %vm533, %v1976, 0.0
        %v1981 = vsel %vm533, %v1977, 0.0
        %v1982 = vadd.f32 %v1980, %v1981
        %v1983 = vrot.slane %v1982, 4
        %v1984 = vadd.f32 %v1982, %v1983
        %v1985 = vrot.slane %v1984, 2
        %v1986 = vadd.f32 %v1984, %v1985
        %v1987 = vrot.slane %v1986, 1
        %v1988 = vadd.f32 %v1986, %v1987
        %v1989 = vmul.f32 %v1988, 0.0625
        %v1990 = vmul.f32 %v1976, %v1976
        %v1991 = vmul.f32 %v1977, %v1977
        %v1992 = vsel %vm533, %v1990, 0.0
        %v1993 = vsel %vm533, %v1991, 0.0
        %v1994 = vadd.f32 %v1992, %v1993
        %v1995 = vrot.slane %v1994, 4
        %v1996 = vadd.f32 %v1994, %v1995
        %v1997 = vrot.slane %v1996, 2
        %v1998 = vadd.f32 %v1996, %v1997
        %v1999 = vrot.slane %v1998, 1
        %v2000 = vadd.f32 %v1998, %v1999
        %v2001 = vmul.f32 %v2000, 0.0625
        %v2002 = vmul.f32 %v1989, %v1989
        %v2003 = vsub.f32 %v2001, %v2002
        %v2004 = vsub.f32 %v1976, %v1989
        %v2005 = vsub.f32 %v1977, %v1989
        %v2006 = vadd.f32 %v2003, 0.001
        %v2007 = vrsqrt.pop %v2006
        %v2008 = vmul.f32 %v2004, %v2007
        %v2009 = vmul.f32 %v2005, %v2007
        %v2011 = vlaneseq
        %v2012 = vshrl.u32 %v2011, 7
        %v2013 = vsub.s32 0, %v2012
        %v2014 = vrot.slane %v1978, %v2013
        %v2016 = vmul.f32 %v2008, %v2014
        %v2017 = vmul.f32 %v2009, %v2014
        %v2019 = vlaneseq
        %v2020 = vshrl.u32 %v2019, 7
        %v2021 = vsub.s32 0, %v2020
        %v2022 = vrot.slane %v1979, %v2021
        %v2024 = vadd.f32 %v2016, %v2022
        %v2025 = vadd.f32 %v2017, %v2022
        %v2026 = vld [vmem:[%s493] sm:$0xff]
        %v2027 = vld [vmem:[%s493 + $0x8] sm:$0xff]
        %v2028 = vld [vmem:[%s493 + $0x10] sm:$0xff]
        %v2029 = vld [vmem:[%s493 + $0x18] sm:$0xff]
        %v2030 = vld [vmem:[%s496] sm:$0x1]
        %v2032 = vlaneseq
        %v2033 = vshrl.u32 %v2032, 7
        %v2034 = vsub.s32 0, %v2033
        %v2035 = vrot.slane %v2030, %v2034
        %v2038 = vsel %vm533, %v2024, 0
        %v2041 = vsel %vm533, %v2025, 0
        %2043 = vmatprep.subr.mxu0 0.0
        %2044 = vmatpush1.msra.mxu0 0.0
        %2045 = vmatprep.subr.mxu0 0.0
        %2046 = vmatpush1.msra.mxu0 0.0
        %2047 = vmatprep.subr.mxu0 0.0
        %2048 = vmatpush1.msra.mxu0 0.0
        %2049 = vmatprep.subr.mxu0 0.0
        %2050 = vmatpush1.msra.mxu0 0.0
        %2051 = vmatprep.subr.mxu0 0.0
        %2052 = vmatpush1.msra.mxu0 0.0
        %2053 = vmatprep.subr.mxu0 0.0
        %2054 = vmatpush1.msra.mxu0 0.0
        %2055 = vmatprep.subr.mxu0 0.0
        %2056 = vmatpush1.msra.mxu0 0.0
        %2057 = vmatprep.subr.mxu0 0.0
        %2058 = vmatpush1.msra.mxu0 0.0
        %2059 = vmatprep.subr.mxu0 0.0
        %2060 = vmatpush1.msra.mxu0 0.0
        %2061 = vmatprep.subr.mxu0 0.0
        %2062 = vmatpush1.msra.mxu0 0.0
        %2063 = vmatprep.subr.mxu0 0.0
        %2064 = vmatpush1.msra.mxu0 0.0
        %2065 = vmatprep.subr.mxu0 0.0
        %2066 = vmatpush1.msra.mxu0 0.0
        %2067 = vmatprep.subr.mxu0 0.0
        %2068 = vmatpush1.msra.mxu0 %v2029
        %2069 = vmatprep.subr.mxu0 0.0
        %2070 = vmatpush1.msra.mxu0 %v2028
        %2071 = vmatprep.subr.mxu0 0.0
        %2072 = vmatpush1.msra.mxu0 %v2027
        %2073 = vmatprep.subr.mxu0 0.0
        %2074 = vmatpush1.msra.mxu0 %v2026
        %2075 = vmatprep.subr.mxu0 0.0
        %2076 = vmatpush2.msra.mxu0 0.0
        %2077 = vmatprep.subr.mxu0 0.0
        %2078 = vmatpush2.msra.mxu0 0.0
        %2079 = vmatprep.subr.mxu0 0.0
        %2080 = vmatpush2.msra.mxu0 0.0
        %2081 = vmatprep.subr.mxu0 0.0
        %2082 = vmatpush2.msra.mxu0 0.0
        %2083 = vmatprep.subr.mxu0 0.0
        %2084 = vmatpush2.msra.mxu0 0.0
        %2085 = vmatprep.subr.mxu0 0.0
        %2086 = vmatpush2.msra.mxu0 0.0
        %2087 = vmatprep.subr.mxu0 0.0
        %2088 = vmatpush2.msra.mxu0 0.0
        %2089 = vmatprep.subr.mxu0 0.0
        %2090 = vmatpush2.msra.mxu0 0.0
        %2091 = vmatprep.subr.mxu0 0.0
        %2092 = vmatpush2.msra.mxu0 0.0
        %2093 = vmatprep.subr.mxu0 0.0
        %2094 = vmatpush2.msra.mxu0 0.0
        %2095 = vmatprep.subr.mxu0 0.0
        %2096 = vmatpush2.msra.mxu0 0.0
        %2097 = vmatprep.subr.mxu0 0.0
        %2098 = vmatpush2.msra.mxu0 0.0
        %2099 = vmatprep.subr.mxu0 0.0
        %2100 = vmatpush2.msra.mxu0 0.0
        %2101 = vmatprep.subr.mxu0 0.0
        %2102 = vmatpush2.msra.mxu0 0.0
        %2103 = vmatprep.subr.mxu0 0.0
        %2104 = vmatpush2.msra.mxu0 0.0
        %2105 = vmatprep.subr.mxu0 0.0
        %2106 = vmatpush2.msra.mxu0 0.0
        %2107 = vmatprep.mubr.f32.mxu0 0.0
        %2108 = vmatmul.mubr.f32.gmra.mxu0 %v2038
        %v2109 = vpop.f32.mrf.mxu0
        %v2110 = vadd.f32 %v2035, %v2109
        %v2111 = vpop.f32.mrf.mxu0
        %2112 = vmatprep.mubr.f32.mxu0 0.0
        %2113 = vmatmul.mubr.f32.gmra.mxu0 %v2041
        %v2114 = vpop.f32.mrf.mxu0
        %v2115 = vadd.f32 %v2035, %v2114
        %v2116 = vpop.f32.mrf.mxu0
        %2117 = vdwg.mxu0
        %v2118 = vmax.f32 %v2110, 0.0
        %v2119 = vmax.f32 %v2115, 0.0
        %v2120 = vld [vmem:[%s501] sm:$0xff]
        %v2121 = vld [vmem:[%s501 + $0x8] sm:$0xff]
        %v2122 = vld [vmem:[%s501 + $0x10] sm:$0xff]
        %v2123 = vld [vmem:[%s501 + $0x18] sm:$0xff]
        %v2124 = vld [vmem:[%s501 + $0x20] sm:$0xff]
        %v2125 = vld [vmem:[%s501 + $0x28] sm:$0xff]
        %v2126 = vld [vmem:[%s501 + $0x30] sm:$0xff]
        %v2127 = vld [vmem:[%s501 + $0x38] sm:$0xff]
        %v2128 = vld [vmem:[%s504] sm:$0x1]
        %v2130 = vlaneseq
        %v2131 = vshrl.u32 %v2130, 7
        %v2132 = vsub.s32 0, %v2131
        %v2133 = vrot.slane %v2128, %v2132
        %vm2135 = vcmask 523264
        %v2137 = vsel %vm2135, %v2118, 0
        %v2140 = vsel %vm2135, %v2119, 0
        %2142 = vmatprep.subr.mxu0 0.0
        %2143 = vmatpush1.msra.mxu0 0.0
        %2144 = vmatprep.subr.mxu0 0.0
        %2145 = vmatpush1.msra.mxu0 0.0
        %2146 = vmatprep.subr.mxu0 0.0
        %2147 = vmatpush1.msra.mxu0 0.0
        %2148 = vmatprep.subr.mxu0 0.0
        %2149 = vmatpush1.msra.mxu0 0.0
        %2150 = vmatprep.subr.mxu0 0.0
        %2151 = vmatpush1.msra.mxu0 0.0
        %2152 = vmatprep.subr.mxu0 0.0
        %2153 = vmatpush1.msra.mxu0 0.0
        %2154 = vmatprep.subr.mxu0 0.0
        %2155 = vmatpush1.msra.mxu0 0.0
        %2156 = vmatprep.subr.mxu0 0.0
        %2157 = vmatpush1.msra.mxu0 0.0
        %2158 = vmatprep.subr.mxu0 0.0
        %2159 = vmatpush1.msra.mxu0 %v2127
        %2160 = vmatprep.subr.mxu0 0.0
        %2161 = vmatpush1.msra.mxu0 %v2126
        %2162 = vmatprep.subr.mxu0 0.0
        %2163 = vmatpush1.msra.mxu0 %v2125
        %2164 = vmatprep.subr.mxu0 0.0
        %2165 = vmatpush1.msra.mxu0 %v2124
        %2166 = vmatprep.subr.mxu0 0.0
        %2167 = vmatpush1.msra.mxu0 %v2123
        %2168 = vmatprep.subr.mxu0 0.0
        %2169 = vmatpush1.msra.mxu0 %v2122
        %2170 = vmatprep.subr.mxu0 0.0
        %2171 = vmatpush1.msra.mxu0 %v2121
        %2172 = vmatprep.subr.mxu0 0.0
        %2173 = vmatpush1.msra.mxu0 %v2120
        %2174 = vmatprep.subr.mxu0 0.0
        %2175 = vmatpush2.msra.mxu0 0.0
        %2176 = vmatprep.subr.mxu0 0.0
        %2177 = vmatpush2.msra.mxu0 0.0
        %2178 = vmatprep.subr.mxu0 0.0
        %2179 = vmatpush2.msra.mxu0 0.0
        %2180 = vmatprep.subr.mxu0 0.0
        %2181 = vmatpush2.msra.mxu0 0.0
        %2182 = vmatprep.subr.mxu0 0.0
        %2183 = vmatpush2.msra.mxu0 0.0
        %2184 = vmatprep.subr.mxu0 0.0
        %2185 = vmatpush2.msra.mxu0 0.0
        %2186 = vmatprep.subr.mxu0 0.0
        %2187 = vmatpush2.msra.mxu0 0.0
        %2188 = vmatprep.subr.mxu0 0.0
        %2189 = vmatpush2.msra.mxu0 0.0
        %2190 = vmatprep.subr.mxu0 0.0
        %2191 = vmatpush2.msra.mxu0 0.0
        %2192 = vmatprep.subr.mxu0 0.0
        %2193 = vmatpush2.msra.mxu0 0.0
        %2194 = vmatprep.subr.mxu0 0.0
        %2195 = vmatpush2.msra.mxu0 0.0
        %2196 = vmatprep.subr.mxu0 0.0
        %2197 = vmatpush2.msra.mxu0 0.0
        %2198 = vmatprep.subr.mxu0 0.0
        %2199 = vmatpush2.msra.mxu0 0.0
        %2200 = vmatprep.subr.mxu0 0.0
        %2201 = vmatpush2.msra.mxu0 0.0
        %2202 = vmatprep.subr.mxu0 0.0
        %2203 = vmatpush2.msra.mxu0 0.0
        %2204 = vmatprep.subr.mxu0 0.0
        %2205 = vmatpush2.msra.mxu0 0.0
        %2206 = vmatprep.mubr.f32.mxu0 0.0
        %2207 = vmatmul.mubr.f32.gmra.mxu0 %v2137
        %v2208 = vpop.f32.mrf.mxu0
        %v2209 = vadd.f32 %v2133, %v2208
        %v2210 = vpop.f32.mrf.mxu0
        %2211 = vmatprep.mubr.f32.mxu0 0.0
        %2212 = vmatmul.mubr.f32.gmra.mxu0 %v2140
        %v2213 = vpop.f32.mrf.mxu0
        %v2214 = vadd.f32 %v2133, %v2213
        %v2215 = vpop.f32.mrf.mxu0
        %2216 = vdwg.mxu0
        %v2217 = vadd.f32 %v2209, %v2024
        %v2218 = vadd.f32 %v2214, %v2025
        %v2219 = vld [vmem:[%s507] sm:$0x1]
        %v2220 = vld [vmem:[%s510] sm:$0x1]
        %v2221 = vsel %vm533, %v2217, 0.0
        %v2222 = vsel %vm533, %v2218, 0.0
        %v2223 = vadd.f32 %v2221, %v2222
        %v2224 = vrot.slane %v2223, 4
        %v2225 = vadd.f32 %v2223, %v2224
        %v2226 = vrot.slane %v2225, 2
        %v2227 = vadd.f32 %v2225, %v2226
        %v2228 = vrot.slane %v2227, 1
        %v2229 = vadd.f32 %v2227, %v2228
        %v2230 = vmul.f32 %v2229, 0.0625
        %v2231 = vmul.f32 %v2217, %v2217
        %v2232 = vmul.f32 %v2218, %v2218
        %v2233 = vsel %vm533, %v2231, 0.0
        %v2234 = vsel %vm533, %v2232, 0.0
        %v2235 = vadd.f32 %v2233, %v2234
        %v2236 = vrot.slane %v2235, 4
        %v2237 = vadd.f32 %v2235, %v2236
        %v2238 = vrot.slane %v2237, 2
        %v2239 = vadd.f32 %v2237, %v2238
        %v2240 = vrot.slane %v2239, 1
        %v2241 = vadd.f32 %v2239, %v2240
        %v2242 = vmul.f32 %v2241, 0.0625
        %v2243 = vmul.f32 %v2230, %v2230
        %v2244 = vsub.f32 %v2242, %v2243
        %v2245 = vsub.f32 %v2217, %v2230
        %v2246 = vsub.f32 %v2218, %v2230
        %v2247 = vadd.f32 %v2244, 0.001
        %v2248 = vrsqrt.pop %v2247
        %v2249 = vmul.f32 %v2245, %v2248
        %v2250 = vmul.f32 %v2246, %v2248
        %v2252 = vlaneseq
        %v2253 = vshrl.u32 %v2252, 7
        %v2254 = vsub.s32 0, %v2253
        %v2255 = vrot.slane %v2219, %v2254
        %v2257 = vmul.f32 %v2249, %v2255
        %v2258 = vmul.f32 %v2250, %v2255
        %v2260 = vlaneseq
        %v2261 = vshrl.u32 %v2260, 7
        %v2262 = vsub.s32 0, %v2261
        %v2263 = vrot.slane %v2220, %v2262
        %v2265 = vadd.f32 %v2257, %v2263
        %v2266 = vadd.f32 %v2258, %v2263
        %2267 = vst.msk [vmem:[#allocation2] sm:$0xff] %vm533, %v2265
        %2268 = vst.msk [vmem:[#allocation2 + $0x8] sm:$0xff] %vm533, %v2266
        %p2269 = scmp.eq.s32.totalorder %s23, 2
        // Predicated region
        $region69: #{tpu_custom_call.1} parent=63 // pred_check
          %p2270 = pneg %p2269
        $region70: #{tpu_custom_call.1} parent=63 // pred_check_branch
          %2272 = sbr.rel (%p2270) target = $region72
        $region71: #{tpu_custom_call.1} parent=63 // pred_region
          %2273 = vst.msk [vmem:[#allocation3] sm:$0xff] %vm533, %v2265
          %2274 = vst.msk [vmem:[#allocation3 + $0x8] sm:$0xff] %vm533, %v2266
        $region72: #{tpu_custom_call.1} parent=63 // pred_fallthru
          _
        // Predicated region
        $region73: #{tpu_custom_call.1} parent=63 // pred_check
          %p2275 = pneg %p317
        $region74: #{tpu_custom_call.1} parent=63 // pred_check_branch
          %2277 = sbr.rel (%p2275) target = $region76
        $region75: #{tpu_custom_call.1} parent=63 // pred_region
          %s2279 = ssub.s32 256, 256
          %2280 = vsyncadd [#allocation4], %s2279
          %s2281 = sshll.u32 [#allocation3], 4
          %s2282 = int_to_ptr.vmem [resolvable:$true] %s2281
          %2287 = dma.vmem_to_hbm [thread:$0]  %s2282, 256, %s11, [#allocation4], 128, 128, 8
        $region76: #{tpu_custom_call.1} parent=63 // pred_fallthru
          _
        // Predicated region
        $region77: #{tpu_custom_call.1} parent=63 // pred_check
          %p2288 = pneg %p317
        $region78: #{tpu_custom_call.1} parent=63 // pred_check_branch
          %2290 = sbr.rel (%p2288) target = $region80
        $region79: #{tpu_custom_call.1} parent=63 // pred_region
          %2291 = dma.done [#allocation4], 256
        $region80: #{tpu_custom_call.1} parent=63 // pred_fallthru
          _
      $region64: #{tpu_custom_call.1} parent=5 // pred_fallthru
        _
      %p2292 = scmp.le.s32.totalorder 2, %s18
      // Predicated region
      $region81: #{tpu_custom_call.1} parent=5 // pred_check
        %p2293 = pneg %p2292
      $region82: #{tpu_custom_call.1} parent=5 // pred_check_branch
        %2295 = sbr.rel (%p2293) target = $region84
      $region83: #{tpu_custom_call.1} parent=5 // pred_region
        %s2296 = ssub.s32 %s18, 2
      $region84: #{tpu_custom_call.1} parent=5 // pred_fallthru
        _
    $region6: #{tpu_custom_call.1} parent=1 // loop_footer
      %s22 = sadd.s32 1, %s18
    $region7: #{tpu_custom_call.1} parent=1 // loop_footer_branch
      %17 = sbr.rel target = $region3
    $region8: #{tpu_custom_call.1} parent=1 // loop_exit
      _
    %2297 = vsyncpa [#allocation4], 1
    %s2298 = scalar_lea.sflag [#allocation4], 1
    %2299 = vsyncpa %s2298, 1

</llo_original>
